<compile_context>
chip_gen: v7x
topology: tpu7x:2x2x1
jax: 0.10.0
libtpu: 0.0.40
codegen_flags: <defaults>
</compile_context>

<pallas_src>
import functools
import math

import jax
import jax.numpy as jnp
from jax.experimental import pallas as pl
from jax.experimental.pallas import tpu as pltpu


# ----------------------------------------------------------------------------
# Kernel
# ----------------------------------------------------------------------------
def _mha_kernel(q_ref, k_ref, v_ref,
                wq_ref, wk_ref, wv_ref, wo_ref,
                bq_ref, bk_ref, bv_ref, bo_ref,
                out_ref, attn_ref, *, scale, activation, mxu_dtype):
    # q_ref/k_ref/v_ref : (1, n, hb, d)   native-layout input block
    # w*_ref            : (d, d)          weights, pre-transposed (y = x @ w)
    # b*_ref            : (1, d)          biases
    # out_ref           : (1, n, hb, d)   activated output, native layout
    # attn_ref          : (1, hb, n, n)   softmax attention probabilities
    n, hb, d = q_ref.shape[1], q_ref.shape[2], q_ref.shape[3]

    def proj_to_head_major(x_ref, w_ref, b_ref):
        # Collapse leading dims only (minor dim preserved -> cheap/robust
        # reshape; note hb < 8 pads sublanes, documented trade-off).
        x2 = x_ref[0].reshape(n * hb, d).astype(mxu_dtype)          # (n*hb, d)
        y = jnp.dot(x2, w_ref[...].astype(mxu_dtype),
                    preferred_element_type=jnp.float32) + b_ref[...]
        # Head-major (hb, n, d): leading-dims transpose, minor dim intact.
        return jnp.transpose(y.reshape(n, hb, d), (1, 0, 2))

    qh = proj_to_head_major(q_ref, wq_ref, bq_ref)                  # (hb, n, d)
    kh = proj_to_head_major(k_ref, wk_ref, bk_ref)
    vh = proj_to_head_major(v_ref, wv_ref, bv_ref)

    # Batched attention over hb heads (leading batch dim -> clean MXU path).
    scores = jnp.einsum('hid,hjd->hij',
                        qh.astype(mxu_dtype), kh.astype(mxu_dtype),
                        preferred_element_type=jnp.float32) * scale  # (hb,n,n)

    # Numerically-stable softmax; divide on the EUP via approx reciprocal.
    m = jnp.max(scores, axis=-1, keepdims=True)
    e = jnp.exp(scores - m)
    denom = jnp.sum(e, axis=-1, keepdims=True)
    probs = e * pl.reciprocal(denom, approx=True)                    # (hb,n,n)
    attn_ref[0] = probs.astype(attn_ref.dtype)
    # (eval-mode dropout on probs == identity; see TODO at file top)

    ctx = jnp.einsum('hij,hjd->hid',
                     probs.astype(mxu_dtype), vh.astype(mxu_dtype),
                     preferred_element_type=jnp.float32)             # (hb,n,d)

    # Back to native (n, hb, d) row order for the output projection + store.
    ctx_nc = jnp.transpose(ctx, (1, 0, 2)).reshape(n * hb, d)        # (n*hb,d)
    o = jnp.dot(ctx_nc.astype(mxu_dtype), wo_ref[...].astype(mxu_dtype),
                preferred_element_type=jnp.float32) + bo_ref[...]
    if activation == 'relu':
        o = jnp.maximum(o, 0.0)
    else:  # 'gelu' -- exact erf variant to match PyTorch nn.GELU default
        o = jax.nn.gelu(o, approximate=False)
    out_ref[0] = o.reshape(n, hb, d).astype(out_ref.dtype)


# ----------------------------------------------------------------------------
# VMEM-aware tile selection
# ----------------------------------------------------------------------------
def _round_up(x, m):
    return -(-x // m) * m


def _vmem_capacity_bytes():
    try:
        cap = getattr(pltpu.get_tpu_info(), "vmem_capacity_bytes", None)
        if cap:
            return int(cap)
    except Exception:
        pass
    return 64 * 1024 * 1024   # conservative fallback = v7x per-TensorCore VMEM


def _estimate_vmem_bytes(hb, n, d, probs_bytes):
    """Padded-tile estimate of the per-step VMEM working set (incl. x2 bufs)."""
    d_pad = _round_up(d, 128)
    n_lane = _round_up(n, 128)
    n_sub = _round_up(n, 8)
    hb_pad = _round_up(hb, 8)
    # double-buffered blocked operands: q, k, v, out   (blocks are (1,n,hb,d))
    blocked = 2 * (4 * n * hb_pad * d_pad * 4)
    # double-buffered attention-probs block (1, hb, n, n)
    blocked += 2 * (hb * n_sub * n_lane * probs_bytes)
    # weights + biases (constant index_map but still allocated double-buffered)
    weights = 2 * (4 * _round_up(d, 8) * d_pad + 4 * 8 * d_pad) * 4
    # in-kernel intermediates: projections, head-major copies, ctx, o (f32)
    # plus bf16 operand copies; scores / e / probs live values.
    interm = n * hb_pad * d_pad * (9 * 4 + 6 * 2)
    interm += hb * n_sub * n_lane * (3 * 4 + 2 * 2)
    return blocked + weights + interm


def _legal_head_block(hb, c, d):
    # Block last-two dims are (hb, d): legal iff they equal the full (c, d)
    # extents, or satisfy the (8, 128) divisibility rule.
    return c % hb == 0 and (hb == c or (hb % 8 == 0 and d % 128 == 0))


def _pick_head_block(bs, n, c, d, probs_bytes, vmem_cap):
    budget = int(0.45 * vmem_cap)
    candidates = [hb for hb in range(c, 0, -1) if _legal_head_block(hb, c, d)]
    hb = None
    for cand in candidates:                       # largest legal tile that fits
        if _estimate_vmem_bytes(cand, n, d, probs_bytes) <= budget:
            hb = cand
            break
    if hb is None:
        hb = candidates[-1]                        # smallest legal; let the
                                                   # explicit vmem limit decide
    # Guarantee >= 2 grid steps so both v7x TensorCores get work.
    if bs * (c // hb) < 2:
        for cand in candidates:
            if cand < hb and bs * (c // cand) >= 2:
                hb = cand
                break
    return hb


# ----------------------------------------------------------------------------
# Wrapper
# ----------------------------------------------------------------------------
def multi_head_attention(q, k, v, wq, bq, wk, bk, wv, bv, wo, bo, *,
                         activation='relu', mxu_dtype=jnp.bfloat16,
                         probs_dtype=None, head_block=None):
    """q, k, v: (bs, n, c, d_model).  Weights in torch nn.Linear layout
    (w: (d, d), y = x @ w.T + b).  Returns (output, attention) matching the
    PyTorch module: output (bs, n, c, d), attention (bs, c, n, n)."""
    bs, n, c, d = q.shape
    assert k.shape == q.shape and v.shape == q.shape
    assert wq.shape == (d, d) and wk.shape == (d, d)
    assert wv.shape == (d, d) and wo.shape == (d, d)
    if probs_dtype is None:
        probs_dtype = q.dtype
    probs_bytes = jnp.dtype(probs_dtype).itemsize

    vmem_cap = _vmem_capacity_bytes()
    hb = head_block if head_block is not None else _pick_head_block(
        bs, n, c, d, probs_bytes, vmem_cap)
    assert _legal_head_block(hb, c, d), "illegal head_block for this shape"
    grid = (bs, c // hb)
    vmem_limit = int(0.9 * vmem_cap)

    # Weight / bias prep (pure layout plumbing, tiny tensors).
    qf, kf, vf = (t.astype(jnp.float32) for t in (q, k, v))
    wq_t = wq.T.astype(jnp.float32)
    wk_t = wk.T.astype(jnp.float32)
    wv_t = wv.T.astype(jnp.float32)
    wo_t = wo.T.astype(jnp.float32)
    bq2 = bq.reshape(1, d).astype(jnp.float32)
    bk2 = bk.reshape(1, d).astype(jnp.float32)
    bv2 = bv.reshape(1, d).astype(jnp.float32)
    bo2 = bo.reshape(1, d).astype(jnp.float32)

    qkv_spec = pl.BlockSpec((1, n, hb, d), lambda b, g: (b, 0, g, 0))
    w_spec = pl.BlockSpec((d, d), lambda b, g: (0, 0))
    b_spec = pl.BlockSpec((1, d), lambda b, g: (0, 0))
    out_spec = pl.BlockSpec((1, n, hb, d), lambda b, g: (b, 0, g, 0))
    attn_spec = pl.BlockSpec((1, hb, n, n), lambda b, g: (b, g, 0, 0))

    kernel = functools.partial(_mha_kernel,
                               scale=float(1.0 / math.sqrt(d)),
                               activation=activation,
                               mxu_dtype=mxu_dtype)

    flops = int(8 * bs * n * c * d * d + 4 * bs * c * n * n * d)
    transcendentals = int(bs * c * n * n)
    bytes_accessed = int(4 * 4 * bs * n * c * d            # q,k,v in + out
                         + bs * c * n * n * probs_bytes    # attention probs
                         + 4 * (4 * d * d + 4 * d))        # weights + biases

    out, attn = pl.pallas_call(
        kernel,
        out_shape=(
            jax.ShapeDtypeStruct((bs, n, c, d), q.dtype),     # native layout
            jax.ShapeDtypeStruct((bs, c, n, n), probs_dtype), # attention probs
        ),
        grid_spec=pltpu.PrefetchScalarGridSpec(
            num_scalar_prefetch=0,
            grid=grid,
            in_specs=[
                qkv_spec, qkv_spec, qkv_spec,
                w_spec, w_spec, w_spec, w_spec,
                b_spec, b_spec, b_spec, b_spec,
            ],
            out_specs=[out_spec, attn_spec],
        ),
        compiler_params=pltpu.CompilerParams(
            dimension_semantics=("parallel", "parallel"),
            vmem_limit_bytes=vmem_limit),
        cost_estimate=pl.CostEstimate(flops=flops,
                                      transcendentals=transcendentals,
                                      bytes_accessed=bytes_accessed),
    )(qf, kf, vf, wq_t, wk_t, wv_t, wo_t, bq2, bk2, bv2, bo2)

    return out, attn


# ----------------------------------------------------------------------------
# Pure-JAX reference + self-test
# ----------------------------------------------------------------------------
def _reference(q, k, v, wq, bq, wk, bk, wv, bv, wo, bo, activation='relu'):
    d = q.shape[-1]
    qp = jnp.transpose(q @ wq.T + bq, (0, 2, 1, 3))             # (bs, c, n, d)
    kp = jnp.transpose(k @ wk.T + bk, (0, 2, 1, 3))
    vp = jnp.transpose(v @ wv.T + bv, (0, 2, 1, 3))
    scores = (qp @ jnp.swapaxes(kp, -2, -1)) / math.sqrt(d)     # (bs, c, n, n)
    probs = jax.nn.softmax(scores, axis=-1)
    ctx = probs @ vp                                            # (bs, c, n, d)
    out = ctx @ wo.T + bo
    out = (jnp.maximum(out, 0.0) if activation == 'relu'
           else jax.nn.gelu(out, approximate=False))
    return jnp.transpose(out, (0, 2, 1, 3)), probs              # (bs,n,c,d)


if __name__ == "__main__":
    # Small shapes consistent with the module: (bs, n, c, d_model).
    bs, n, c, d_model = 2, 8, 4, 32

    key = jax.random.PRNGKey(0)
    ks = jax.random.split(key, 11)
    q = jax.random.normal(ks[0], (bs, n, c, d_model), dtype=jnp.float32)
    k = jax.random.normal(ks[1], (bs, n, c, d_model), dtype=jnp.float32)
    v = jax.random.normal(ks[2], (bs, n, c, d_model), dtype=jnp.float32)

    bound = 1.0 / math.sqrt(d_model)          # nn.Linear-style init (synthetic)
    def lin_init(kw, kb):
        w = jax.random.uniform(kw, (d_model, d_model), minval=-bound,
                               maxval=bound, dtype=jnp.float32)
        b = jax.random.uniform(kb, (d_model,), minval=-bound,
                               maxval=bound, dtype=jnp.float32)
        return w, b

    wq, bq = lin_init(ks[3], ks[4])
    wk, bk = lin_init(ks[5], ks[6])
    wv, bv = lin_init(ks[7], ks[8])
    wo, bo = lin_init(ks[9], ks[10])

    out, attn = multi_head_attention(q, k, v, wq, bq, wk, bk, wv, bv, wo, bo,
                                     activation='relu')
    out = jax.block_until_ready(out)
    attn = jax.block_until_ready(attn)

    ref_out, ref_attn = _reference(q, k, v, wq, bq, wk, bk, wv, bv, wo, bo,
                                   activation='relu')
    assert out.shape == (bs, n, c, d_model)
    assert attn.shape == (bs, c, n, n)
    # Tolerances loosened deliberately: MXU operands are bf16 (f32 accumulate).
    assert jnp.allclose(out, ref_out, atol=5e-2, rtol=5e-2), \
        float(jnp.max(jnp.abs(out - ref_out)))
    assert jnp.allclose(attn, ref_attn, atol=2e-2, rtol=2e-2), \
        float(jnp.max(jnp.abs(attn - ref_attn)))
    print("KERNEL_OK")
</pallas_src>

<mosaic_0001>
module attributes {stable_mosaic.version = 11 : i64} {
  func.func @_mha_kernel(%arg0: i32, %arg1: i32, %arg2: memref<1x8x4x32xf32, #tpu.memory_space<vmem>>, %arg3: memref<1x8x4x32xf32, #tpu.memory_space<vmem>>, %arg4: memref<1x8x4x32xf32, #tpu.memory_space<vmem>>, %arg5: memref<32x32xf32, #tpu.memory_space<vmem>>, %arg6: memref<32x32xf32, #tpu.memory_space<vmem>>, %arg7: memref<32x32xf32, #tpu.memory_space<vmem>>, %arg8: memref<32x32xf32, #tpu.memory_space<vmem>>, %arg9: memref<1x32xf32, #tpu.memory_space<vmem>>, %arg10: memref<1x32xf32, #tpu.memory_space<vmem>>, %arg11: memref<1x32xf32, #tpu.memory_space<vmem>>, %arg12: memref<1x32xf32, #tpu.memory_space<vmem>>, %arg13: memref<1x8x4x32xf32, #tpu.memory_space<vmem>>, %arg14: memref<1x4x8x8xf32, #tpu.memory_space<vmem>>) attributes {dimension_semantics = [#tpu.dimension_semantics<parallel>, #tpu.dimension_semantics<parallel>], iteration_bounds = array<i64: 2, 1>, scalar_prefetch = 0 : i64, scratch_operands = 0 : i64, tpu.core_type = #tpu.core_type<tc>, window_params = [{transform_indices = @transform_0, window_bounds = array<i64: 1, 8, 4, 32>}, {transform_indices = @transform_1, window_bounds = array<i64: 1, 8, 4, 32>}, {transform_indices = @transform_2, window_bounds = array<i64: 1, 8, 4, 32>}, {pipeline_mode = #tpu.pipeline_mode<synchronous>, transform_indices = @transform_3, window_bounds = array<i64: 32, 32>}, {pipeline_mode = #tpu.pipeline_mode<synchronous>, transform_indices = @transform_4, window_bounds = array<i64: 32, 32>}, {pipeline_mode = #tpu.pipeline_mode<synchronous>, transform_indices = @transform_5, window_bounds = array<i64: 32, 32>}, {pipeline_mode = #tpu.pipeline_mode<synchronous>, transform_indices = @transform_6, window_bounds = array<i64: 32, 32>}, {pipeline_mode = #tpu.pipeline_mode<synchronous>, transform_indices = @transform_7, window_bounds = array<i64: 1, 32>}, {pipeline_mode = #tpu.pipeline_mode<synchronous>, transform_indices = @transform_8, window_bounds = array<i64: 1, 32>}, {pipeline_mode = #tpu.pipeline_mode<synchronous>, transform_indices = @transform_9, window_bounds = array<i64: 1, 32>}, {pipeline_mode = #tpu.pipeline_mode<synchronous>, transform_indices = @transform_10, window_bounds = array<i64: 1, 32>}, {transform_indices = @transform_11, window_bounds = array<i64: 1, 8, 4, 32>}, {transform_indices = @transform_12, window_bounds = array<i64: 1, 4, 8, 8>}]} {
    %c0 = arith.constant 0 : index
    %c0_0 = arith.constant 0 : index
    %c0_1 = arith.constant 0 : index
    %c0_2 = arith.constant 0 : index
    %0 = vector.load %arg2[%c0, %c0_0, %c0_1, %c0_2] : memref<1x8x4x32xf32, #tpu.memory_space<vmem>>, vector<1x8x4x32xf32>
    %1 = vector.shape_cast %0 : vector<1x8x4x32xf32> to vector<8x4x32xf32>
    %2 = vector.shape_cast %1 : vector<8x4x32xf32> to vector<32x32xf32>
    %3 = arith.truncf %2 : vector<32x32xf32> to vector<32x32xbf16>
    %c0_3 = arith.constant 0 : index
    %c0_4 = arith.constant 0 : index
    %4 = vector.load %arg5[%c0_3, %c0_4] : memref<32x32xf32, #tpu.memory_space<vmem>>, vector<32x32xf32>
    %5 = arith.truncf %4 : vector<32x32xf32> to vector<32x32xbf16>
    %cst = arith.constant dense<0.000000e+00> : vector<32x32xf32>
    %6 = tpu.matmul %3, %5, %cst {dimension_numbers = #tpu.dot_dimension_numbers<[1], [0], [0], [1], [0, 0, 1, 1], [], []>} : vector<32x32xbf16>, vector<32x32xbf16>, vector<32x32xf32> -> vector<32x32xf32>
    %c0_5 = arith.constant 0 : index
    %c0_6 = arith.constant 0 : index
    %7 = vector.load %arg9[%c0_5, %c0_6] : memref<1x32xf32, #tpu.memory_space<vmem>>, vector<1x32xf32>
    %8 = vector.broadcast %7 : vector<1x32xf32> to vector<32x32xf32>
    %9 = arith.addf %6, %8 : vector<32x32xf32>
    %10 = vector.shape_cast %9 : vector<32x32xf32> to vector<8x4x32xf32>
    %11 = tpu.transpose %10, [1, 0, 2] : vector<8x4x32xf32> -> vector<4x8x32xf32>
    %c0_7 = arith.constant 0 : index
    %c0_8 = arith.constant 0 : index
    %c0_9 = arith.constant 0 : index
    %c0_10 = arith.constant 0 : index
    %12 = vector.load %arg3[%c0_7, %c0_8, %c0_9, %c0_10] : memref<1x8x4x32xf32, #tpu.memory_space<vmem>>, vector<1x8x4x32xf32>
    %13 = vector.shape_cast %12 : vector<1x8x4x32xf32> to vector<8x4x32xf32>
    %14 = vector.shape_cast %13 : vector<8x4x32xf32> to vector<32x32xf32>
    %15 = arith.truncf %14 : vector<32x32xf32> to vector<32x32xbf16>
    %c0_11 = arith.constant 0 : index
    %c0_12 = arith.constant 0 : index
    %16 = vector.load %arg6[%c0_11, %c0_12] : memref<32x32xf32, #tpu.memory_space<vmem>>, vector<32x32xf32>
    %17 = arith.truncf %16 : vector<32x32xf32> to vector<32x32xbf16>
    %cst_13 = arith.constant dense<0.000000e+00> : vector<32x32xf32>
    %18 = tpu.matmul %15, %17, %cst_13 {dimension_numbers = #tpu.dot_dimension_numbers<[1], [0], [0], [1], [0, 0, 1, 1], [], []>} : vector<32x32xbf16>, vector<32x32xbf16>, vector<32x32xf32> -> vector<32x32xf32>
    %c0_14 = arith.constant 0 : index
    %c0_15 = arith.constant 0 : index
    %19 = vector.load %arg10[%c0_14, %c0_15] : memref<1x32xf32, #tpu.memory_space<vmem>>, vector<1x32xf32>
    %20 = vector.broadcast %19 : vector<1x32xf32> to vector<32x32xf32>
    %21 = arith.addf %18, %20 : vector<32x32xf32>
    %22 = vector.shape_cast %21 : vector<32x32xf32> to vector<8x4x32xf32>
    %23 = tpu.transpose %22, [1, 0, 2] : vector<8x4x32xf32> -> vector<4x8x32xf32>
    %c0_16 = arith.constant 0 : index
    %c0_17 = arith.constant 0 : index
    %c0_18 = arith.constant 0 : index
    %c0_19 = arith.constant 0 : index
    %24 = vector.load %arg4[%c0_16, %c0_17, %c0_18, %c0_19] : memref<1x8x4x32xf32, #tpu.memory_space<vmem>>, vector<1x8x4x32xf32>
    %25 = vector.shape_cast %24 : vector<1x8x4x32xf32> to vector<8x4x32xf32>
    %26 = vector.shape_cast %25 : vector<8x4x32xf32> to vector<32x32xf32>
    %27 = arith.truncf %26 : vector<32x32xf32> to vector<32x32xbf16>
    %c0_20 = arith.constant 0 : index
    %c0_21 = arith.constant 0 : index
    %28 = vector.load %arg7[%c0_20, %c0_21] : memref<32x32xf32, #tpu.memory_space<vmem>>, vector<32x32xf32>
    %29 = arith.truncf %28 : vector<32x32xf32> to vector<32x32xbf16>
    %cst_22 = arith.constant dense<0.000000e+00> : vector<32x32xf32>
    %30 = tpu.matmul %27, %29, %cst_22 {dimension_numbers = #tpu.dot_dimension_numbers<[1], [0], [0], [1], [0, 0, 1, 1], [], []>} : vector<32x32xbf16>, vector<32x32xbf16>, vector<32x32xf32> -> vector<32x32xf32>
    %c0_23 = arith.constant 0 : index
    %c0_24 = arith.constant 0 : index
    %31 = vector.load %arg11[%c0_23, %c0_24] : memref<1x32xf32, #tpu.memory_space<vmem>>, vector<1x32xf32>
    %32 = vector.broadcast %31 : vector<1x32xf32> to vector<32x32xf32>
    %33 = arith.addf %30, %32 : vector<32x32xf32>
    %34 = vector.shape_cast %33 : vector<32x32xf32> to vector<8x4x32xf32>
    %35 = tpu.transpose %34, [1, 0, 2] : vector<8x4x32xf32> -> vector<4x8x32xf32>
    %36 = arith.truncf %11 : vector<4x8x32xf32> to vector<4x8x32xbf16>
    %37 = arith.truncf %23 : vector<4x8x32xf32> to vector<4x8x32xbf16>
    "tpu.trace_start"() <{level = 10 : i32, message = "hid,hjd->hij"}> : () -> ()
    %cst_25 = arith.constant dense<0.000000e+00> : vector<4x8x8xf32>
    %38 = tpu.matmul %36, %37, %cst_25 {dimension_numbers = #tpu.dot_dimension_numbers<[2], [2], [1], [1], [0, 0, 0, 1, 1, 1], [0], [0]>} : vector<4x8x32xbf16>, vector<4x8x32xbf16>, vector<4x8x8xf32> -> vector<4x8x8xf32>
    "tpu.trace_stop"() : () -> ()
    %cst_26 = arith.constant 0.176776692 : f32
    %39 = vector.broadcast %cst_26 : f32 to vector<4x8x8xf32>
    %40 = arith.mulf %38, %39 : vector<4x8x8xf32>
    %cst_27 = arith.constant dense<0xFF800000> : vector<4x8xf32>
    %41 = vector.multi_reduction <maximumf>, %40, %cst_27 [2] : vector<4x8x8xf32> to vector<4x8xf32>
    %42 = vector.shape_cast %41 : vector<4x8xf32> to vector<4x8x1xf32>
    %43 = vector.broadcast %42 : vector<4x8x1xf32> to vector<4x8x8xf32>
    %44 = arith.subf %40, %43 : vector<4x8x8xf32>
    %45 = math.exp %44 : vector<4x8x8xf32>
    %cst_28 = arith.constant dense<0.000000e+00> : vector<4x8xf32>
    %46 = vector.multi_reduction <add>, %45, %cst_28 [2] : vector<4x8x8xf32> to vector<4x8xf32>
    %47 = vector.shape_cast %46 : vector<4x8xf32> to vector<4x8x1xf32>
    %48 = tpu.reciprocal %47 {approx = true} : vector<4x8x1xf32> -> vector<4x8x1xf32>
    %49 = vector.broadcast %48 : vector<4x8x1xf32> to vector<4x8x8xf32>
    %50 = arith.mulf %45, %49 : vector<4x8x8xf32>
    %c0_29 = arith.constant 0 : index
    %c0_30 = arith.constant 0 : index
    %c0_31 = arith.constant 0 : index
    %c0_32 = arith.constant 0 : index
    %51 = vector.load %arg14[%c0_29, %c0_30, %c0_31, %c0_32] : memref<1x4x8x8xf32, #tpu.memory_space<vmem>>, vector<1x4x8x8xf32>
    %52 = vector.shape_cast %51 : vector<1x4x8x8xf32> to vector<4x8x8xf32>
    %53 = vector.shape_cast %50 : vector<4x8x8xf32> to vector<1x4x8x8xf32>
    tpu.vector_store %arg14[%c0_29, %c0_30, %c0_31, %c0_32], %53 {strides = array<i32>} : memref<1x4x8x8xf32, #tpu.memory_space<vmem>>, vector<1x4x8x8xf32>,
    %54 = arith.truncf %50 : vector<4x8x8xf32> to vector<4x8x8xbf16>
    %55 = arith.truncf %35 : vector<4x8x32xf32> to vector<4x8x32xbf16>
    "tpu.trace_start"() <{level = 10 : i32, message = "hij,hjd->hid"}> : () -> ()
    %cst_33 = arith.constant dense<0.000000e+00> : vector<4x8x32xf32>
    %56 = tpu.matmul %54, %55, %cst_33 {dimension_numbers = #tpu.dot_dimension_numbers<[2], [1], [1], [2], [0, 0, 0, 1, 1, 2], [0], [0]>} : vector<4x8x8xbf16>, vector<4x8x32xbf16>, vector<4x8x32xf32> -> vector<4x8x32xf32>
    "tpu.trace_stop"() : () -> ()
    %57 = tpu.transpose %56, [1, 0, 2] : vector<4x8x32xf32> -> vector<8x4x32xf32>
    %58 = vector.shape_cast %57 : vector<8x4x32xf32> to vector<32x32xf32>
    %59 = arith.truncf %58 : vector<32x32xf32> to vector<32x32xbf16>
    %c0_34 = arith.constant 0 : index
    %c0_35 = arith.constant 0 : index
    %60 = vector.load %arg8[%c0_34, %c0_35] : memref<32x32xf32, #tpu.memory_space<vmem>>, vector<32x32xf32>
    %61 = arith.truncf %60 : vector<32x32xf32> to vector<32x32xbf16>
    %cst_36 = arith.constant dense<0.000000e+00> : vector<32x32xf32>
    %62 = tpu.matmul %59, %61, %cst_36 {dimension_numbers = #tpu.dot_dimension_numbers<[1], [0], [0], [1], [0, 0, 1, 1], [], []>} : vector<32x32xbf16>, vector<32x32xbf16>, vector<32x32xf32> -> vector<32x32xf32>
    %c0_37 = arith.constant 0 : index
    %c0_38 = arith.constant 0 : index
    %63 = vector.load %arg12[%c0_37, %c0_38] : memref<1x32xf32, #tpu.memory_space<vmem>>, vector<1x32xf32>
    %64 = vector.broadcast %63 : vector<1x32xf32> to vector<32x32xf32>
    %65 = arith.addf %62, %64 : vector<32x32xf32>
    %cst_39 = arith.constant 0.000000e+00 : f32
    %66 = vector.broadcast %cst_39 : f32 to vector<32x32xf32>
    %67 = arith.maximumf %65, %66 : vector<32x32xf32>
    %68 = vector.shape_cast %67 : vector<32x32xf32> to vector<8x4x32xf32>
    %c0_40 = arith.constant 0 : index
    %c0_41 = arith.constant 0 : index
    %c0_42 = arith.constant 0 : index
    %c0_43 = arith.constant 0 : index
    %69 = vector.load %arg13[%c0_40, %c0_41, %c0_42, %c0_43] : memref<1x8x4x32xf32, #tpu.memory_space<vmem>>, vector<1x8x4x32xf32>
    %70 = vector.shape_cast %69 : vector<1x8x4x32xf32> to vector<8x4x32xf32>
    %71 = vector.shape_cast %68 : vector<8x4x32xf32> to vector<1x8x4x32xf32>
    tpu.vector_store %arg13[%c0_40, %c0_41, %c0_42, %c0_43], %71 {strides = array<i32>} : memref<1x8x4x32xf32, #tpu.memory_space<vmem>>, vector<1x8x4x32xf32>,
    return
  }
  func.func @transform_0(%arg0: i32, %arg1: i32) -> (i32, i32, i32, i32) {
    %c0_i32 = arith.constant 0 : i32
    %c0_i32_0 = arith.constant 0 : i32
    %c0_i32_1 = arith.constant 0 : i32
    return %arg0, %c0_i32, %arg1, %c0_i32_0 : i32, i32, i32, i32
  }
  func.func @transform_1(%arg0: i32, %arg1: i32) -> (i32, i32, i32, i32) {
    %c0_i32 = arith.constant 0 : i32
    %c0_i32_0 = arith.constant 0 : i32
    %c0_i32_1 = arith.constant 0 : i32
    return %arg0, %c0_i32, %arg1, %c0_i32_0 : i32, i32, i32, i32
  }
  func.func @transform_2(%arg0: i32, %arg1: i32) -> (i32, i32, i32, i32) {
    %c0_i32 = arith.constant 0 : i32
    %c0_i32_0 = arith.constant 0 : i32
    %c0_i32_1 = arith.constant 0 : i32
    return %arg0, %c0_i32, %arg1, %c0_i32_0 : i32, i32, i32, i32
  }
  func.func @transform_3(%arg0: i32, %arg1: i32) -> (i32, i32) {
    %c0_i32 = arith.constant 0 : i32
    %c0_i32_0 = arith.constant 0 : i32
    %c0_i32_1 = arith.constant 0 : i32
    return %c0_i32, %c0_i32_0 : i32, i32
  }
  func.func @transform_4(%arg0: i32, %arg1: i32) -> (i32, i32) {
    %c0_i32 = arith.constant 0 : i32
    %c0_i32_0 = arith.constant 0 : i32
    %c0_i32_1 = arith.constant 0 : i32
    return %c0_i32, %c0_i32_0 : i32, i32
  }
  func.func @transform_5(%arg0: i32, %arg1: i32) -> (i32, i32) {
    %c0_i32 = arith.constant 0 : i32
    %c0_i32_0 = arith.constant 0 : i32
    %c0_i32_1 = arith.constant 0 : i32
    return %c0_i32, %c0_i32_0 : i32, i32
  }
  func.func @transform_6(%arg0: i32, %arg1: i32) -> (i32, i32) {
    %c0_i32 = arith.constant 0 : i32
    %c0_i32_0 = arith.constant 0 : i32
    %c0_i32_1 = arith.constant 0 : i32
    return %c0_i32, %c0_i32_0 : i32, i32
  }
  func.func @transform_7(%arg0: i32, %arg1: i32) -> (i32, i32) {
    %c0_i32 = arith.constant 0 : i32
    %c0_i32_0 = arith.constant 0 : i32
    %c0_i32_1 = arith.constant 0 : i32
    return %c0_i32, %c0_i32_0 : i32, i32
  }
  func.func @transform_8(%arg0: i32, %arg1: i32) -> (i32, i32) {
    %c0_i32 = arith.constant 0 : i32
    %c0_i32_0 = arith.constant 0 : i32
    %c0_i32_1 = arith.constant 0 : i32
    return %c0_i32, %c0_i32_0 : i32, i32
  }
  func.func @transform_9(%arg0: i32, %arg1: i32) -> (i32, i32) {
    %c0_i32 = arith.constant 0 : i32
    %c0_i32_0 = arith.constant 0 : i32
    %c0_i32_1 = arith.constant 0 : i32
    return %c0_i32, %c0_i32_0 : i32, i32
  }
  func.func @transform_10(%arg0: i32, %arg1: i32) -> (i32, i32) {
    %c0_i32 = arith.constant 0 : i32
    %c0_i32_0 = arith.constant 0 : i32
    %c0_i32_1 = arith.constant 0 : i32
    return %c0_i32, %c0_i32_0 : i32, i32
  }
  func.func @transform_11(%arg0: i32, %arg1: i32) -> (i32, i32, i32, i32) {
    %c0_i32 = arith.constant 0 : i32
    %c0_i32_0 = arith.constant 0 : i32
    %c0_i32_1 = arith.constant 0 : i32
    return %arg0, %c0_i32, %arg1, %c0_i32_0 : i32, i32, i32, i32
  }
  func.func @transform_12(%arg0: i32, %arg1: i32) -> (i32, i32, i32, i32) {
    %c0_i32 = arith.constant 0 : i32
    %c0_i32_0 = arith.constant 0 : i32
    %c0_i32_1 = arith.constant 0 : i32
    return %arg0, %arg1, %c0_i32, %c0_i32_0 : i32, i32, i32, i32
  }
}

</mosaic_0001>

<llo_original>
// kernel: tpu_custom_call.1
$region0: #{tpu_custom_call.1}
  #allocation0 [shape = 'u32[]', space=smem, size = 0x4, offset = 0x4, fixed_abs, tag = 'smem constant byte address 0x4 - core index']
  #allocation1 [shape = 'u32[144,128]{1,0:T(1,128)}', space=vmem, size = 0x12000, scoped, tag = 'internal scratch']
  %s0 = inlined_call_operand.hbm [shape: f32[2,8,4,32], index: 0, kind: input, shape index: {}]
  %s1 = inlined_call_operand.hbm [shape: f32[2,8,4,32], index: 1, kind: input, shape index: {}]
  %s2 = inlined_call_operand.hbm [shape: f32[2,8,4,32], index: 2, kind: input, shape index: {}]
  %s3 = inlined_call_operand.hbm [shape: f32[32,32], index: 3, kind: input, shape index: {}]
  %s4 = inlined_call_operand.hbm [shape: f32[32,32], index: 4, kind: input, shape index: {}]
  %s5 = inlined_call_operand.hbm [shape: f32[32,32], index: 5, kind: input, shape index: {}]
  %s6 = inlined_call_operand.hbm [shape: f32[32,32], index: 6, kind: input, shape index: {}]
  %s7 = inlined_call_operand.vmem [shape: f32[1,32], index: 7, kind: input, shape index: {}]
  %s8 = inlined_call_operand.vmem [shape: f32[1,32], index: 8, kind: input, shape index: {}]
  %s9 = inlined_call_operand.vmem [shape: f32[1,32], index: 9, kind: input, shape index: {}]
  %s10 = inlined_call_operand.vmem [shape: f32[1,32], index: 10, kind: input, shape index: {}]
  %s11 = inlined_call_operand.hbm [shape: f32[2,8,4,32], index: 11, kind: output, shape index: {0}]
  %s12 = inlined_call_operand.hbm [shape: f32[2,4,8,8], index: 12, kind: output, shape index: {1}]
  %13 = xla_tuple %s11, %s12
  %s14 = sld [smem:[#allocation0]]
  $region113: #{tpu_custom_call.1} parent=0
    _
  %s16 = ssub.s32 1, %s14
  %s17 = scalar_select 0, %s16, %s14
  $region1: #{tpu_custom_call.1} parent=0
    #allocation2 [shape = 'u8[32768]{0}', space=vmem, size = 0x8000, scoped, tag = 'input window, operand 0']
    #allocation3 [shape = 's32[2]{0}', space=sflag, size = 0x8, scoped, tag = 'scoped memory for tpu_custom_call.1']
    #allocation4 [shape = 's32[2]{0}', space=sflag, size = 0x8, scoped, tag = 'scoped memory for tpu_custom_call.1']
    #allocation5 [shape = 'u8[32768]{0}', space=vmem, size = 0x8000, scoped, tag = 'input window, operand 1']
    #allocation6 [shape = 's32[2]{0}', space=sflag, size = 0x8, scoped, tag = 'scoped memory for tpu_custom_call.1']
    #allocation7 [shape = 'u8[32768]{0}', space=vmem, size = 0x8000, scoped, tag = 'input window, operand 2']
    #allocation8 [shape = 'u8[16384]{0}', space=vmem, size = 0x4000, scoped, tag = 'input window, operand 3, single buffered']
    #allocation9 [shape = 's32[1]{0}', space=sflag, size = 0x4, scoped, tag = 'scoped memory for tpu_custom_call.1']
    #allocation10 [shape = 'u8[16384]{0}', space=vmem, size = 0x4000, scoped, tag = 'input window, operand 4, single buffered']
    #allocation11 [shape = 'u8[16384]{0}', space=vmem, size = 0x4000, scoped, tag = 'input window, operand 5, single buffered']
    #allocation12 [shape = 's32[1]{0}', space=sflag, size = 0x4, scoped, tag = 'scoped memory for tpu_custom_call.1']
    #allocation13 [shape = 'u8[16384]{0}', space=vmem, size = 0x4000, scoped, tag = 'input window, operand 6, single buffered']
    #allocation14 [shape = 'u8[32768]{0}', space=vmem, size = 0x8000, scoped, tag = 'output window, operand 0']
    #allocation15 [shape = 'u8[32768]{0}', space=vmem, size = 0x8000, scoped, tag = 'output window, operand 1']
    #allocation16 [shape = 's32[2]{0}', space=sflag, size = 0x8, scoped, tag = 'scoped memory for tpu_custom_call.1']
    %18 = vsyncpa [#allocation3], 0
    %s19 = scalar_lea.sflag [#allocation3], 1
    %20 = vsyncpa %s19, 0
    %21 = vsyncpa [#allocation6], 0
    %s22 = scalar_lea.sflag [#allocation6], 1
    %23 = vsyncpa %s22, 0
    %24 = vsyncpa [#allocation9], 0
    %25 = vsyncpa [#allocation12], 0
    %26 = vsyncpa [#allocation4], 0
    %s27 = scalar_lea.sflag [#allocation4], 1
    %28 = vsyncpa %s27, 0
    %29 = vsyncpa [#allocation16], 0
    %s30 = scalar_lea.sflag [#allocation16], 1
    %31 = vsyncpa %s30, 0
    loop: start=0, step=1, limit=4
    $region2: #{tpu_custom_call.1} parent=1 // loop_pre_header
      _
    $region3: #{tpu_custom_call.1} parent=1 // loop_header
      %s33 = sphi 0, %s37
      %p34 = scmp.ge.s32.totalorder %s33, 4
      %s40 = sphi 0, %s52
      %s41 = sphi 0, %s48
      %s42 = sphi 0, %s40
      %s43 = sphi 0, %s41
      %s44 = sphi 0, %s42
      %s45 = sphi 0, %s43
      %s57 = sphi 0, %s59
      %s60 = sphi 0, %s57
      %s61 = sphi 0, %s60
      %s77 = sphi 0, %s61
      %s85 = sphi 0, %s87
      %s88 = sphi 0, %s85
      %s89 = sphi 0, %s88
      %s105 = sphi 0, %s89
      %s113 = sphi 0, %s115
      %s116 = sphi 0, %s113
      %s117 = sphi 0, %s116
      %s133 = sphi 0, %s117
      %s137 = sphi 0, %s137
      %s139 = sphi 0, %s137
      %s140 = sphi 0, %s139
      %s154 = sphi 0, %s140
      %s158 = sphi 0, %s158
      %s160 = sphi 0, %s158
      %s161 = sphi 0, %s160
      %s175 = sphi 0, %s161
      %s179 = sphi 0, %s179
      %s181 = sphi 0, %s179
      %s182 = sphi 0, %s181
      %s196 = sphi 0, %s182
      %s200 = sphi 0, %s200
      %s202 = sphi 0, %s200
      %s203 = sphi 0, %s202
      %s217 = sphi 0, %s203
      %s221 = sphi 0, %s221
      %s223 = sphi 0, %s221
      %s224 = sphi 0, %s223
      %s238 = sphi 0, %s224
      %s242 = sphi 0, %s242
      %s244 = sphi 0, %s242
      %s245 = sphi 0, %s244
      %s259 = sphi 0, %s245
      %s263 = sphi 0, %s263
      %s265 = sphi 0, %s263
      %s266 = sphi 0, %s265
      %s280 = sphi 0, %s266
      %s284 = sphi 0, %s284
      %s286 = sphi 0, %s284
      %s287 = sphi 0, %s286
      %s301 = sphi 0, %s287
      %s309 = sphi 0, %s311
      %s312 = sphi 0, %s309
      %s313 = sphi 0, %s312
      %s329 = sphi 0, %s313
      %s337 = sphi 0, %s339
      %s340 = sphi 0, %s337
      %s341 = sphi 0, %s340
      %s357 = sphi 0, %s341
    $region4: #{tpu_custom_call.1} parent=1 // loop_header_branch
      %36 = sbr.rel (%p34) target = $region8
    $region5: #{tpu_custom_call.1} parent=1 // loop_body
      %s38 = ssub.s32 %s33, 1
      %s39 = ssub.s32 %s33, 2
      %s46 = sadd.s32 1, %s41
      %p47 = scmp.ge.s32.totalorder %s46, 1
      %s48 = scalar_select %p47, 0, %s46
      %s49 = sadd.s32 1, %s40
      %s50 = scalar_select %p47, %s49, %s40
      %p51 = scmp.ge.s32.totalorder %s50, 2
      %s52 = scalar_select %p51, 0, %s50
      %s53 = ssub.s32 %s40, %s52
      %s54 = ssub.s32 %s41, %s48
      %s55 = sor.u32 %s53, %s54
      %p56 = scmp.eq.s32.totalorder %s55, 0
      %s58 = sadd.s32 %s57, 1
      %s59 = scalar_select %p56, %s57, %s58
      %p62 = pneg %p56
      %p63 = scmp.eq.s32.totalorder %s33, 1
      %p64 = por %p62, %p63
      %p65 = scmp.ne.s32.totalorder %s57, %s60
      %p66 = scmp.eq.s32.totalorder %s33, 0
      %p67 = por %p65, %p66
      %p68 = scmp.ne.s32.totalorder %s57, %s60
      %p69 = scmp.eq.s32.totalorder %s38, 1
      %p70 = por %p68, %p69
      %p71 = scmp.ne.s32.totalorder %s60, %s61
      %p72 = scmp.eq.s32.totalorder %s38, 0
      %p73 = por %p71, %p72
      %p74 = scmp.ne.s32.totalorder %s60, %s61
      %p75 = scmp.eq.s32.totalorder %s39, 1
      %p76 = por %p74, %p75
      %p78 = scmp.ne.s32.totalorder %s61, %s77
      %p79 = scmp.eq.s32.totalorder %s39, 0
      %p80 = por %p78, %p79
      %s81 = ssub.s32 %s40, %s52
      %s82 = ssub.s32 %s41, %s48
      %s83 = sor.u32 %s81, %s82
      %p84 = scmp.eq.s32.totalorder %s83, 0
      %s86 = sadd.s32 %s85, 1
      %s87 = scalar_select %p84, %s85, %s86
      %p90 = pneg %p84
      %p91 = scmp.eq.s32.totalorder %s33, 1
      %p92 = por %p90, %p91
      %p93 = scmp.ne.s32.totalorder %s85, %s88
      %p94 = scmp.eq.s32.totalorder %s33, 0
      %p95 = por %p93, %p94
      %p96 = scmp.ne.s32.totalorder %s85, %s88
      %p97 = scmp.eq.s32.totalorder %s38, 1
      %p98 = por %p96, %p97
      %p99 = scmp.ne.s32.totalorder %s88, %s89
      %p100 = scmp.eq.s32.totalorder %s38, 0
      %p101 = por %p99, %p100
      %p102 = scmp.ne.s32.totalorder %s88, %s89
      %p103 = scmp.eq.s32.totalorder %s39, 1
      %p104 = por %p102, %p103
      %p106 = scmp.ne.s32.totalorder %s89, %s105
      %p107 = scmp.eq.s32.totalorder %s39, 0
      %p108 = por %p106, %p107
      %s109 = ssub.s32 %s40, %s52
      %s110 = ssub.s32 %s41, %s48
      %s111 = sor.u32 %s109, %s110
      %p112 = scmp.eq.s32.totalorder %s111, 0
      %s114 = sadd.s32 %s113, 1
      %s115 = scalar_select %p112, %s113, %s114
      %p118 = pneg %p112
      %p119 = scmp.eq.s32.totalorder %s33, 1
      %p120 = por %p118, %p119
      %p121 = scmp.ne.s32.totalorder %s113, %s116
      %p122 = scmp.eq.s32.totalorder %s33, 0
      %p123 = por %p121, %p122
      %p124 = scmp.ne.s32.totalorder %s113, %s116
      %p125 = scmp.eq.s32.totalorder %s38, 1
      %p126 = por %p124, %p125
      %p127 = scmp.ne.s32.totalorder %s116, %s117
      %p128 = scmp.eq.s32.totalorder %s38, 0
      %p129 = por %p127, %p128
      %p130 = scmp.ne.s32.totalorder %s116, %s117
      %p131 = scmp.eq.s32.totalorder %s39, 1
      %p132 = por %p130, %p131
      %p134 = scmp.ne.s32.totalorder %s117, %s133
      %p135 = scmp.eq.s32.totalorder %s39, 0
      %p136 = por %p134, %p135
      %s138 = sadd.s32 %s137, 1
      %p141 = scmp.eq.s32.totalorder %s33, 1
      %p142 = scmp.ne.s32.totalorder %s137, %s139
      %p143 = scmp.eq.s32.totalorder %s33, 0
      %p144 = por %p142, %p143
      %p145 = scmp.ne.s32.totalorder %s137, %s139
      %p146 = scmp.eq.s32.totalorder %s38, 1
      %p147 = por %p145, %p146
      %p148 = scmp.ne.s32.totalorder %s139, %s140
      %p149 = scmp.eq.s32.totalorder %s38, 0
      %p150 = por %p148, %p149
      %p151 = scmp.ne.s32.totalorder %s139, %s140
      %p152 = scmp.eq.s32.totalorder %s39, 1
      %p153 = por %p151, %p152
      %p155 = scmp.ne.s32.totalorder %s140, %s154
      %p156 = scmp.eq.s32.totalorder %s39, 0
      %p157 = por %p155, %p156
      %s159 = sadd.s32 %s158, 1
      %p162 = scmp.eq.s32.totalorder %s33, 1
      %p163 = scmp.ne.s32.totalorder %s158, %s160
      %p164 = scmp.eq.s32.totalorder %s33, 0
      %p165 = por %p163, %p164
      %p166 = scmp.ne.s32.totalorder %s158, %s160
      %p167 = scmp.eq.s32.totalorder %s38, 1
      %p168 = por %p166, %p167
      %p169 = scmp.ne.s32.totalorder %s160, %s161
      %p170 = scmp.eq.s32.totalorder %s38, 0
      %p171 = por %p169, %p170
      %p172 = scmp.ne.s32.totalorder %s160, %s161
      %p173 = scmp.eq.s32.totalorder %s39, 1
      %p174 = por %p172, %p173
      %p176 = scmp.ne.s32.totalorder %s161, %s175
      %p177 = scmp.eq.s32.totalorder %s39, 0
      %p178 = por %p176, %p177
      %s180 = sadd.s32 %s179, 1
      %p183 = scmp.eq.s32.totalorder %s33, 1
      %p184 = scmp.ne.s32.totalorder %s179, %s181
      %p185 = scmp.eq.s32.totalorder %s33, 0
      %p186 = por %p184, %p185
      %p187 = scmp.ne.s32.totalorder %s179, %s181
      %p188 = scmp.eq.s32.totalorder %s38, 1
      %p189 = por %p187, %p188
      %p190 = scmp.ne.s32.totalorder %s181, %s182
      %p191 = scmp.eq.s32.totalorder %s38, 0
      %p192 = por %p190, %p191
      %p193 = scmp.ne.s32.totalorder %s181, %s182
      %p194 = scmp.eq.s32.totalorder %s39, 1
      %p195 = por %p193, %p194
      %p197 = scmp.ne.s32.totalorder %s182, %s196
      %p198 = scmp.eq.s32.totalorder %s39, 0
      %p199 = por %p197, %p198
      %s201 = sadd.s32 %s200, 1
      %p204 = scmp.eq.s32.totalorder %s33, 1
      %p205 = scmp.ne.s32.totalorder %s200, %s202
      %p206 = scmp.eq.s32.totalorder %s33, 0
      %p207 = por %p205, %p206
      %p208 = scmp.ne.s32.totalorder %s200, %s202
      %p209 = scmp.eq.s32.totalorder %s38, 1
      %p210 = por %p208, %p209
      %p211 = scmp.ne.s32.totalorder %s202, %s203
      %p212 = scmp.eq.s32.totalorder %s38, 0
      %p213 = por %p211, %p212
      %p214 = scmp.ne.s32.totalorder %s202, %s203
      %p215 = scmp.eq.s32.totalorder %s39, 1
      %p216 = por %p214, %p215
      %p218 = scmp.ne.s32.totalorder %s203, %s217
      %p219 = scmp.eq.s32.totalorder %s39, 0
      %p220 = por %p218, %p219
      %s222 = sadd.s32 %s221, 1
      %p225 = scmp.eq.s32.totalorder %s33, 1
      %p226 = scmp.ne.s32.totalorder %s221, %s223
      %p227 = scmp.eq.s32.totalorder %s33, 0
      %p228 = por %p226, %p227
      %p229 = scmp.ne.s32.totalorder %s221, %s223
      %p230 = scmp.eq.s32.totalorder %s38, 1
      %p231 = por %p229, %p230
      %p232 = scmp.ne.s32.totalorder %s223, %s224
      %p233 = scmp.eq.s32.totalorder %s38, 0
      %p234 = por %p232, %p233
      %p235 = scmp.ne.s32.totalorder %s223, %s224
      %p236 = scmp.eq.s32.totalorder %s39, 1
      %p237 = por %p235, %p236
      %p239 = scmp.ne.s32.totalorder %s224, %s238
      %p240 = scmp.eq.s32.totalorder %s39, 0
      %p241 = por %p239, %p240
      %s243 = sadd.s32 %s242, 1
      %p246 = scmp.eq.s32.totalorder %s33, 1
      %p247 = scmp.ne.s32.totalorder %s242, %s244
      %p248 = scmp.eq.s32.totalorder %s33, 0
      %p249 = por %p247, %p248
      %p250 = scmp.ne.s32.totalorder %s242, %s244
      %p251 = scmp.eq.s32.totalorder %s38, 1
      %p252 = por %p250, %p251
      %p253 = scmp.ne.s32.totalorder %s244, %s245
      %p254 = scmp.eq.s32.totalorder %s38, 0
      %p255 = por %p253, %p254
      %p256 = scmp.ne.s32.totalorder %s244, %s245
      %p257 = scmp.eq.s32.totalorder %s39, 1
      %p258 = por %p256, %p257
      %p260 = scmp.ne.s32.totalorder %s245, %s259
      %p261 = scmp.eq.s32.totalorder %s39, 0
      %p262 = por %p260, %p261
      %s264 = sadd.s32 %s263, 1
      %p267 = scmp.eq.s32.totalorder %s33, 1
      %p268 = scmp.ne.s32.totalorder %s263, %s265
      %p269 = scmp.eq.s32.totalorder %s33, 0
      %p270 = por %p268, %p269
      %p271 = scmp.ne.s32.totalorder %s263, %s265
      %p272 = scmp.eq.s32.totalorder %s38, 1
      %p273 = por %p271, %p272
      %p274 = scmp.ne.s32.totalorder %s265, %s266
      %p275 = scmp.eq.s32.totalorder %s38, 0
      %p276 = por %p274, %p275
      %p277 = scmp.ne.s32.totalorder %s265, %s266
      %p278 = scmp.eq.s32.totalorder %s39, 1
      %p279 = por %p277, %p278
      %p281 = scmp.ne.s32.totalorder %s266, %s280
      %p282 = scmp.eq.s32.totalorder %s39, 0
      %p283 = por %p281, %p282
      %s285 = sadd.s32 %s284, 1
      %p288 = scmp.eq.s32.totalorder %s33, 1
      %p289 = scmp.ne.s32.totalorder %s284, %s286
      %p290 = scmp.eq.s32.totalorder %s33, 0
      %p291 = por %p289, %p290
      %p292 = scmp.ne.s32.totalorder %s284, %s286
      %p293 = scmp.eq.s32.totalorder %s38, 1
      %p294 = por %p292, %p293
      %p295 = scmp.ne.s32.totalorder %s286, %s287
      %p296 = scmp.eq.s32.totalorder %s38, 0
      %p297 = por %p295, %p296
      %p298 = scmp.ne.s32.totalorder %s286, %s287
      %p299 = scmp.eq.s32.totalorder %s39, 1
      %p300 = por %p298, %p299
      %p302 = scmp.ne.s32.totalorder %s287, %s301
      %p303 = scmp.eq.s32.totalorder %s39, 0
      %p304 = por %p302, %p303
      %s305 = ssub.s32 %s40, %s52
      %s306 = ssub.s32 %s41, %s48
      %s307 = sor.u32 %s305, %s306
      %p308 = scmp.eq.s32.totalorder %s307, 0
      %s310 = sadd.s32 %s309, 1
      %s311 = scalar_select %p308, %s309, %s310
      %p314 = pneg %p308
      %p315 = scmp.eq.s32.totalorder %s33, 1
      %p316 = por %p314, %p315
      %p317 = scmp.ne.s32.totalorder %s309, %s312
      %p318 = scmp.eq.s32.totalorder %s33, 0
      %p319 = por %p317, %p318
      %p320 = scmp.ne.s32.totalorder %s309, %s312
      %p321 = scmp.eq.s32.totalorder %s38, 1
      %p322 = por %p320, %p321
      %p323 = scmp.ne.s32.totalorder %s312, %s313
      %p324 = scmp.eq.s32.totalorder %s38, 0
      %p325 = por %p323, %p324
      %p326 = scmp.ne.s32.totalorder %s312, %s313
      %p327 = scmp.eq.s32.totalorder %s39, 1
      %p328 = por %p326, %p327
      %p330 = scmp.ne.s32.totalorder %s313, %s329
      %p331 = scmp.eq.s32.totalorder %s39, 0
      %p332 = por %p330, %p331
      %s333 = ssub.s32 %s40, %s52
      %s334 = ssub.s32 %s41, %s48
      %s335 = sor.u32 %s333, %s334
      %p336 = scmp.eq.s32.totalorder %s335, 0
      %s338 = sadd.s32 %s337, 1
      %s339 = scalar_select %p336, %s337, %s338
      %p342 = pneg %p336
      %p343 = scmp.eq.s32.totalorder %s33, 1
      %p344 = por %p342, %p343
      %p345 = scmp.ne.s32.totalorder %s337, %s340
      %p346 = scmp.eq.s32.totalorder %s33, 0
      %p347 = por %p345, %p346
      %p348 = scmp.ne.s32.totalorder %s337, %s340
      %p349 = scmp.eq.s32.totalorder %s38, 1
      %p350 = por %p348, %p349
      %p351 = scmp.ne.s32.totalorder %s340, %s341
      %p352 = scmp.eq.s32.totalorder %s38, 0
      %p353 = por %p351, %p352
      %p354 = scmp.ne.s32.totalorder %s340, %s341
      %p355 = scmp.eq.s32.totalorder %s39, 1
      %p356 = por %p354, %p355
      %p358 = scmp.ne.s32.totalorder %s341, %s357
      %p359 = scmp.eq.s32.totalorder %s39, 0
      %p360 = por %p358, %p359
      %p361 = scmp.le.s32.totalorder 1, %s33
      %p362 = scmp.lt.s32.totalorder %s33, 3
      %p363 = pnand %p361, %p362
      %p364 = pneg %p363
      // Predicated region
      $region9: #{tpu_custom_call.1} parent=5 // pred_check
        _
      $region10: #{tpu_custom_call.1} parent=5 // pred_check_branch
        %366 = sbr.rel (%p363) target = $region12
      $region11: #{tpu_custom_call.1} parent=5 // pred_region
        %s367 = ssub.s32 %s33, 1
        // Predicated region
        $region13: #{tpu_custom_call.1} parent=11 // pred_check
          %p368 = pneg %p150
        $region14: #{tpu_custom_call.1} parent=11 // pred_check_branch
          %370 = sbr.rel (%p368) target = $region16
        $region15: #{tpu_custom_call.1} parent=11 // pred_region
          %s372 = ssub.s32 512, 512
          %373 = vsyncadd [#allocation9], %s372
          %s374 = sshll.u32 [#allocation8], 4
          %s375 = int_to_ptr.vmem [resolvable:$true] %s374
          %380 = dma.hbm_to_vmem [thread:$0]  %s3, 512, %s375, [#allocation9], 128, 128, 8
        $region16: #{tpu_custom_call.1} parent=11 // pred_fallthru
          _
        // Predicated region
        $region17: #{tpu_custom_call.1} parent=11 // pred_check
          %p381 = pneg %p171
        $region18: #{tpu_custom_call.1} parent=11 // pred_check_branch
          %383 = sbr.rel (%p381) target = $region20
        $region19: #{tpu_custom_call.1} parent=11 // pred_region
          %s385 = ssub.s32 512, 512
          %386 = vsyncadd [#allocation9], %s385
          %s387 = sshll.u32 [#allocation10], 4
          %s388 = int_to_ptr.vmem [resolvable:$true] %s387
          %393 = dma.hbm_to_vmem [thread:$0]  %s4, 512, %s388, [#allocation9], 128, 128, 8
        $region20: #{tpu_custom_call.1} parent=11 // pred_fallthru
          _
        // Predicated region
        $region21: #{tpu_custom_call.1} parent=11 // pred_check
          %p394 = pneg %p192
        $region22: #{tpu_custom_call.1} parent=11 // pred_check_branch
          %396 = sbr.rel (%p394) target = $region24
        $region23: #{tpu_custom_call.1} parent=11 // pred_region
          %s398 = ssub.s32 512, 512
          %399 = vsyncadd [#allocation12], %s398
          %s400 = sshll.u32 [#allocation11], 4
          %s401 = int_to_ptr.vmem [resolvable:$true] %s400
          %406 = dma.hbm_to_vmem [thread:$0]  %s5, 512, %s401, [#allocation12], 128, 128, 8
        $region24: #{tpu_custom_call.1} parent=11 // pred_fallthru
          _
        // Predicated region
        $region25: #{tpu_custom_call.1} parent=11 // pred_check
          %p407 = pneg %p213
        $region26: #{tpu_custom_call.1} parent=11 // pred_check_branch
          %409 = sbr.rel (%p407) target = $region28
        $region27: #{tpu_custom_call.1} parent=11 // pred_region
          %s411 = ssub.s32 512, 512
          %412 = vsyncadd [#allocation12], %s411
          %s413 = sshll.u32 [#allocation13], 4
          %s414 = int_to_ptr.vmem [resolvable:$true] %s413
          %419 = dma.hbm_to_vmem [thread:$0]  %s6, 512, %s414, [#allocation12], 128, 128, 8
        $region28: #{tpu_custom_call.1} parent=11 // pred_fallthru
          _
        // Predicated region
        $region29: #{tpu_custom_call.1} parent=11 // pred_check
          %p420 = pneg %p234
        $region30: #{tpu_custom_call.1} parent=11 // pred_check_branch
          %422 = sbr.rel (%p420) target = $region32
        $region31: #{tpu_custom_call.1} parent=11 // pred_region
          _
        $region32: #{tpu_custom_call.1} parent=11 // pred_fallthru
          _
        // Predicated region
        $region33: #{tpu_custom_call.1} parent=11 // pred_check
          %p423 = pneg %p255
        $region34: #{tpu_custom_call.1} parent=11 // pred_check_branch
          %425 = sbr.rel (%p423) target = $region36
        $region35: #{tpu_custom_call.1} parent=11 // pred_region
          _
        $region36: #{tpu_custom_call.1} parent=11 // pred_fallthru
          _
        // Predicated region
        $region37: #{tpu_custom_call.1} parent=11 // pred_check
          %p426 = pneg %p276
        $region38: #{tpu_custom_call.1} parent=11 // pred_check_branch
          %428 = sbr.rel (%p426) target = $region40
        $region39: #{tpu_custom_call.1} parent=11 // pred_region
          _
        $region40: #{tpu_custom_call.1} parent=11 // pred_fallthru
          _
        // Predicated region
        $region41: #{tpu_custom_call.1} parent=11 // pred_check
          %p429 = pneg %p297
        $region42: #{tpu_custom_call.1} parent=11 // pred_check_branch
          %431 = sbr.rel (%p429) target = $region44
        $region43: #{tpu_custom_call.1} parent=11 // pred_region
          _
        $region44: #{tpu_custom_call.1} parent=11 // pred_fallthru
          _
      $region12: #{tpu_custom_call.1} parent=5 // pred_fallthru
        _
      %p432 = scmp.lt.s32.totalorder %s33, 2
      // Predicated region
      $region45: #{tpu_custom_call.1} parent=5 // pred_check
        %p433 = pneg %p432
      $region46: #{tpu_custom_call.1} parent=5 // pred_check_branch
        %435 = sbr.rel (%p433) target = $region48
      $region47: #{tpu_custom_call.1} parent=5 // pred_region
        // Predicated region
        $region49: #{tpu_custom_call.1} parent=47 // pred_check
          %p436 = pneg %p67
        $region50: #{tpu_custom_call.1} parent=47 // pred_check_branch
          %438 = sbr.rel (%p436) target = $region52
        $region51: #{tpu_custom_call.1} parent=47 // pred_region
          %s439 = sand.u32 %s57, 1
          %s440 = scalar_lea.sflag [#allocation3], %s439
          %s441 = sand.u32 %s57, 1
          %s442 = smul.addr %s441, 32
          %s443 = scalar_lea.vmem [#allocation2], %s442
          %s445 = ssub.s32 512, 512
          %446 = vsyncadd %s440, %s445
          %s447 = smul.addr %s40, 8
          %s448 = sadd.s32 %s41, %s447
          %s449 = smul.addr %s448, 64
          %s450 = scalar_lea.hbm %s0, %s449
          %s451 = sshll.u32 %s443, 4
          %s452 = int_to_ptr.vmem [resolvable:$true] %s451
          %457 = dma.hbm_to_vmem [thread:$0]  %s450, 512, %s452, %s440, 64, 64, 4
        $region52: #{tpu_custom_call.1} parent=47 // pred_fallthru
          _
        // Predicated region
        $region53: #{tpu_custom_call.1} parent=47 // pred_check
          %p458 = pneg %p95
        $region54: #{tpu_custom_call.1} parent=47 // pred_check_branch
          %460 = sbr.rel (%p458) target = $region56
        $region55: #{tpu_custom_call.1} parent=47 // pred_region
          %s461 = sand.u32 %s33, 1
          %s462 = scalar_lea.sflag [#allocation6], %s461
          %s463 = sand.u32 %s85, 1
          %s464 = smul.addr %s463, 32
          %s465 = scalar_lea.vmem [#allocation5], %s464
          %s467 = ssub.s32 512, 512
          %468 = vsyncadd %s462, %s467
          %s469 = smul.addr %s40, 8
          %s470 = sadd.s32 %s41, %s469
          %s471 = smul.addr %s470, 64
          %s472 = scalar_lea.hbm %s1, %s471
          %s473 = sshll.u32 %s465, 4
          %s474 = int_to_ptr.vmem [resolvable:$true] %s473
          %479 = dma.hbm_to_vmem [thread:$0]  %s472, 512, %s474, %s462, 64, 64, 4
        $region56: #{tpu_custom_call.1} parent=47 // pred_fallthru
          _
        // Predicated region
        $region57: #{tpu_custom_call.1} parent=47 // pred_check
          %p480 = pneg %p123
        $region58: #{tpu_custom_call.1} parent=47 // pred_check_branch
          %482 = sbr.rel (%p480) target = $region60
        $region59: #{tpu_custom_call.1} parent=47 // pred_region
          %s483 = sand.u32 %s33, 1
          %s484 = scalar_lea.sflag [#allocation6], %s483
          %s485 = sand.u32 %s113, 1
          %s486 = smul.addr %s485, 32
          %s487 = scalar_lea.vmem [#allocation7], %s486
          %s489 = ssub.s32 512, 512
          %490 = vsyncadd %s484, %s489
          %s491 = smul.addr %s40, 8
          %s492 = sadd.s32 %s41, %s491
          %s493 = smul.addr %s492, 64
          %s494 = scalar_lea.hbm %s2, %s493
          %s495 = sshll.u32 %s487, 4
          %s496 = int_to_ptr.vmem [resolvable:$true] %s495
          %501 = dma.hbm_to_vmem [thread:$0]  %s494, 512, %s496, %s484, 64, 64, 4
        $region60: #{tpu_custom_call.1} parent=47 // pred_fallthru
          _
      $region48: #{tpu_custom_call.1} parent=5 // pred_fallthru
        _
      %p502 = scmp.le.s32.totalorder 1, %s33
      %p503 = scmp.lt.s32.totalorder %s33, 3
      %p504 = pnand %p502, %p503
      %p505 = pneg %p504
      // Predicated region
      $region61: #{tpu_custom_call.1} parent=5 // pred_check
        _
      $region62: #{tpu_custom_call.1} parent=5 // pred_check_branch
        %507 = sbr.rel (%p504) target = $region64
      $region63: #{tpu_custom_call.1} parent=5 // pred_region
        %s508 = ssub.s32 %s33, 1
        %s509 = sand.u32 %s60, 1
        %s510 = scalar_lea.sflag [#allocation3], %s509
        %s511 = sand.u32 %s60, 1
        %s512 = smul.addr %s511, 32
        %s513 = scalar_lea.vmem [#allocation2], %s512
        // Predicated region
        $region65: #{tpu_custom_call.1} parent=63 // pred_check
          %p514 = pneg %p73
        $region66: #{tpu_custom_call.1} parent=63 // pred_check_branch
          %516 = sbr.rel (%p514) target = $region68
        $region67: #{tpu_custom_call.1} parent=63 // pred_region
          %517 = dma.done %s510, 512
        $region68: #{tpu_custom_call.1} parent=63 // pred_fallthru
          _
        %s518 = sand.u32 %s38, 1
        %s519 = scalar_lea.sflag [#allocation6], %s518
        %s520 = sand.u32 %s88, 1
        %s521 = smul.addr %s520, 32
        %s522 = scalar_lea.vmem [#allocation5], %s521
        // Predicated region
        $region69: #{tpu_custom_call.1} parent=63 // pred_check
          %p523 = pneg %p101
        $region70: #{tpu_custom_call.1} parent=63 // pred_check_branch
          %525 = sbr.rel (%p523) target = $region72
        $region71: #{tpu_custom_call.1} parent=63 // pred_region
          %526 = dma.done %s519, 512
        $region72: #{tpu_custom_call.1} parent=63 // pred_fallthru
          _
        %s527 = sand.u32 %s38, 1
        %s528 = scalar_lea.sflag [#allocation6], %s527
        %s529 = sand.u32 %s116, 1
        %s530 = smul.addr %s529, 32
        %s531 = scalar_lea.vmem [#allocation7], %s530
        // Predicated region
        $region73: #{tpu_custom_call.1} parent=63 // pred_check
          %p532 = pneg %p129
        $region74: #{tpu_custom_call.1} parent=63 // pred_check_branch
          %534 = sbr.rel (%p532) target = $region76
        $region75: #{tpu_custom_call.1} parent=63 // pred_region
          %535 = dma.done %s528, 512
        $region76: #{tpu_custom_call.1} parent=63 // pred_fallthru
          _
        // Predicated region
        $region77: #{tpu_custom_call.1} parent=63 // pred_check
          %p536 = pneg %p150
        $region78: #{tpu_custom_call.1} parent=63 // pred_check_branch
          %538 = sbr.rel (%p536) target = $region80
        $region79: #{tpu_custom_call.1} parent=63 // pred_region
          %539 = dma.done [#allocation9], 512
        $region80: #{tpu_custom_call.1} parent=63 // pred_fallthru
          _
        // Predicated region
        $region81: #{tpu_custom_call.1} parent=63 // pred_check
          %p540 = pneg %p171
        $region82: #{tpu_custom_call.1} parent=63 // pred_check_branch
          %542 = sbr.rel (%p540) target = $region84
        $region83: #{tpu_custom_call.1} parent=63 // pred_region
          %543 = dma.done [#allocation9], 512
        $region84: #{tpu_custom_call.1} parent=63 // pred_fallthru
          _
        // Predicated region
        $region85: #{tpu_custom_call.1} parent=63 // pred_check
          %p544 = pneg %p192
        $region86: #{tpu_custom_call.1} parent=63 // pred_check_branch
          %546 = sbr.rel (%p544) target = $region88
        $region87: #{tpu_custom_call.1} parent=63 // pred_region
          %547 = dma.done [#allocation12], 512
        $region88: #{tpu_custom_call.1} parent=63 // pred_fallthru
          _
        // Predicated region
        $region89: #{tpu_custom_call.1} parent=63 // pred_check
          %p548 = pneg %p213
        $region90: #{tpu_custom_call.1} parent=63 // pred_check_branch
          %550 = sbr.rel (%p548) target = $region92
        $region91: #{tpu_custom_call.1} parent=63 // pred_region
          %551 = dma.done [#allocation12], 512
        $region92: #{tpu_custom_call.1} parent=63 // pred_fallthru
          _
        %s552 = sand.u32 %s60, 1
        %s553 = scalar_lea.sflag [#allocation3], %s552
        %s554 = sand.u32 %s60, 1
        %s555 = smul.addr %s554, 32
        %s556 = scalar_lea.vmem [#allocation2], %s555
        %p557 = pneg %p73
        %p558 = pneg %p70
        %s559 = sand.u32 %s38, 1
        %s560 = scalar_lea.sflag [#allocation6], %s559
        %s561 = sand.u32 %s88, 1
        %s562 = smul.addr %s561, 32
        %s563 = scalar_lea.vmem [#allocation5], %s562
        %p564 = pneg %p101
        %p565 = pneg %p98
        %s566 = sand.u32 %s38, 1
        %s567 = scalar_lea.sflag [#allocation6], %s566
        %s568 = sand.u32 %s116, 1
        %s569 = smul.addr %s568, 32
        %s570 = scalar_lea.vmem [#allocation7], %s569
        %p571 = pneg %p129
        %p572 = pneg %p126
        %p573 = pneg %p150
        %p574 = pneg %p147
        %p575 = pneg %p171
        %p576 = pneg %p168
        %p577 = pneg %p192
        %p578 = pneg %p189
        %p579 = pneg %p213
        %p580 = pneg %p210
        %p581 = pneg %p234
        %p582 = pneg %p231
        %p583 = pneg %p255
        %p584 = pneg %p252
        %p585 = pneg %p276
        %p586 = pneg %p273
        %p587 = pneg %p297
        %p588 = pneg %p294
        %p589 = pneg %p325
        %p590 = pneg %p322
        %s591 = sand.u32 %s312, 1
        %s592 = scalar_lea.sflag [#allocation4], %s591
        %s593 = sand.u32 %s312, 1
        %s594 = smul.addr %s593, 32
        %s595 = scalar_lea.vmem [#allocation14], %s594
        %p596 = pneg %p353
        %p597 = pneg %p350
        %s598 = sand.u32 %s340, 1
        %s599 = scalar_lea.sflag [#allocation16], %s598
        %s600 = sand.u32 %s340, 1
        %s601 = smul.addr %s600, 32
        %s602 = scalar_lea.vmem [#allocation15], %s601
        %s603 = smul.u32 4, %s43
        %v605 = vld [vmem:[%s513] sm:$0xf]
        %v606 = vld [vmem:[%s513 + $0x4] sm:$0xf]
        %v607 = vld [vmem:[%s513 + $0x8] sm:$0xf]
        %v608 = vld [vmem:[%s513 + $0xc] sm:$0xf]
        %v609 = vld [vmem:[%s513 + $0x10] sm:$0xf]
        %v610 = vld [vmem:[%s513 + $0x14] sm:$0xf]
        %v611 = vld [vmem:[%s513 + $0x18] sm:$0xf]
        %v612 = vld [vmem:[%s513 + $0x1c] sm:$0xf]
        %v621 = vcombine.low %v605, %v606
        %v622 = vcombine.low %v607, %v608
        %v623 = vcombine.low %v609, %v610
        %v624 = vcombine.low %v611, %v612
        %v629 = vpack.c.bf16 %v622, %v621
        %v630 = vpack.c.bf16 %v624, %v623
        %v631 = vld [vmem:[#allocation8] sm:$0xff]
        %v632 = vld [vmem:[#allocation8 + $0x8] sm:$0xff]
        %v633 = vld [vmem:[#allocation8 + $0x10] sm:$0xff]
        %v634 = vld [vmem:[#allocation8 + $0x18] sm:$0xff]
        %v635 = vpack.c.bf16 %v632, %v631
        %v636 = vpack.c.bf16 %v634, %v633
        %v637 = vld [vmem:[%s7] sm:$0x1]
        %v639 = vlaneseq
        %v640 = vshrl.u32 %v639, 7
        %v641 = vsub.s32 0, %v640
        %v642 = vrot.slane %v637, %v641
        %vm644 = vcmask 261120
        %v646 = vsel %vm644, %v629, 0
        %v649 = vsel %vm644, %v630, 0
        %651 = vmatprep.subr.bf16.mxu0 0
        %652 = vmatpush1.bf16.msra.mxu0 %v635
        %653 = vmatprep.subr.bf16.mxu0 0
        %654 = vmatpush1.bf16.msra.mxu0 %v636
        %655 = vmatprep.subr.bf16.mxu0 0
        %656 = vmatpush1.bf16.msra.mxu0 0
        %657 = vmatprep.subr.bf16.mxu0 0
        %658 = vmatpush1.bf16.msra.mxu0 0
        %659 = vmatprep.subr.bf16.mxu0 0
        %660 = vmatpush1.bf16.msra.mxu0 0
        %661 = vmatprep.subr.bf16.mxu0 0
        %662 = vmatpush1.bf16.msra.mxu0 0
        %663 = vmatprep.subr.bf16.mxu0 0
        %664 = vmatpush1.bf16.msra.mxu0 0
        %665 = vmatprep.subr.bf16.mxu0 0
        %666 = vmatpush1.bf16.msra.mxu0 0
        %667 = vmatprep.subr.bf16.mxu0 0
        %668 = vmatpush1.bf16.msra.mxu0 0
        %669 = vmatprep.subr.bf16.mxu0 0
        %670 = vmatpush1.bf16.msra.mxu0 0
        %671 = vmatprep.subr.bf16.mxu0 0
        %672 = vmatpush1.bf16.msra.mxu0 0
        %673 = vmatprep.subr.bf16.mxu0 0
        %674 = vmatpush1.bf16.msra.mxu0 0
        %675 = vmatprep.subr.bf16.mxu0 0
        %676 = vmatpush1.bf16.msra.mxu0 0
        %677 = vmatprep.subr.bf16.mxu0 0
        %678 = vmatpush1.bf16.msra.mxu0 0
        %679 = vmatprep.subr.bf16.mxu0 0
        %680 = vmatpush1.bf16.msra.mxu0 0
        %681 = vmatprep.subr.bf16.mxu0 0
        %682 = vmatpush1.bf16.msra.mxu0 0
        %683 = vmatprep.mubr.bf16.mxu0 0
        %684 = vmatmul.mubr.bf16.gmra.mrb[0].mxu0 %v646
        %v685 = vpop.f32.mrb[0].mxu0
        %v686 = vadd.f32 %v642, %v685
        %v687 = vpop.f32.mrb[0].mxu0
        %v688 = vpop.f32.mrb[0].mxu0
        %v689 = vadd.f32 %v642, %v688
        %v690 = vpop.f32.mrb[0].mxu0
        %691 = vmatprep.mubr.bf16.mxu0 0
        %692 = vmatmul.mubr.bf16.gmra.mrb[0].mxu0 %v649
        %v693 = vpop.f32.mrb[0].mxu0
        %v694 = vadd.f32 %v642, %v693
        %v695 = vpop.f32.mrb[0].mxu0
        %v696 = vpop.f32.mrb[0].mxu0
        %v697 = vadd.f32 %v642, %v696
        %v698 = vpop.f32.mrb[0].mxu0
        %699 = vdwg.mxu0
        %v704 = vcombine.high %v686, %v686
        %v705 = vcombine.high %v689, %v689
        %v706 = vcombine.high %v694, %v694
        %v707 = vcombine.high %v697, %v697
        %v712 = vcombine.low %v686, %v689
        %v714 = vunpack.c.l.s4 1983009808
        %v715 = vunpack.c.0.s8 %v714
        %v716 = vlaneseq
        %v717 = vshrl.u32 %v716, 7
        %v718 = vsub.s32 %v715, %v717
        %v719 = vrot.slane %v712, %v718
        %v720 = vcombine.low %v704, %v705
        %v722 = vunpack.c.l.s4 1983009808
        %v723 = vunpack.c.0.s8 %v722
        %v724 = vlaneseq
        %v725 = vshrl.u32 %v724, 7
        %v726 = vsub.s32 %v723, %v725
        %v727 = vrot.slane %v720, %v726
        %v728 = vcombine.low %v719, %v727
        %v729 = vcombine.high %v719, %v727
        %v731 = vunpack.c.l.s4 1934713408
        %v732 = vunpack.c.0.s8 %v731
        %v733 = vlaneseq
        %v734 = vshrl.u32 %v733, 7
        %v735 = vsub.s32 %v732, %v734
        %v736 = vrot.slane %v728, %v735
        %v738 = vunpack.c.l.s4 1934713408
        %v739 = vunpack.c.0.s8 %v738
        %v740 = vlaneseq
        %v741 = vshrl.u32 %v740, 7
        %v742 = vsub.s32 %v739, %v741
        %v743 = vrot.slane %v729, %v742
        %v744 = vcombine.high %v736, 0.0
        %v745 = vcombine.high %v743, 0.0
        %v746 = vcombine.low %v694, %v697
        %v748 = vunpack.c.l.s4 1983009808
        %v749 = vunpack.c.0.s8 %v748
        %v750 = vlaneseq
        %v751 = vshrl.u32 %v750, 7
        %v752 = vsub.s32 %v749, %v751
        %v753 = vrot.slane %v746, %v752
        %v754 = vcombine.low %v706, %v707
        %v756 = vunpack.c.l.s4 1983009808
        %v757 = vunpack.c.0.s8 %v756
        %v758 = vlaneseq
        %v759 = vshrl.u32 %v758, 7
        %v760 = vsub.s32 %v757, %v759
        %v761 = vrot.slane %v754, %v760
        %v762 = vcombine.low %v753, %v761
        %v763 = vcombine.high %v753, %v761
        %v765 = vunpack.c.l.s4 1934713408
        %v766 = vunpack.c.0.s8 %v765
        %v767 = vlaneseq
        %v768 = vshrl.u32 %v767, 7
        %v769 = vsub.s32 %v766, %v768
        %v770 = vrot.slane %v762, %v769
        %v772 = vunpack.c.l.s4 1934713408
        %v773 = vunpack.c.0.s8 %v772
        %v774 = vlaneseq
        %v775 = vshrl.u32 %v774, 7
        %v776 = vsub.s32 %v773, %v775
        %v777 = vrot.slane %v763, %v776
        %v778 = vcombine.high %v770, 0.0
        %v779 = vcombine.high %v777, 0.0
        %v780 = vld [vmem:[%s522] sm:$0xf]
        %v781 = vld [vmem:[%s522 + $0x4] sm:$0xf]
        %v782 = vld [vmem:[%s522 + $0x8] sm:$0xf]
        %v783 = vld [vmem:[%s522 + $0xc] sm:$0xf]
        %v784 = vld [vmem:[%s522 + $0x10] sm:$0xf]
        %v785 = vld [vmem:[%s522 + $0x14] sm:$0xf]
        %v786 = vld [vmem:[%s522 + $0x18] sm:$0xf]
        %v787 = vld [vmem:[%s522 + $0x1c] sm:$0xf]
        %v796 = vcombine.low %v780, %v781
        %v797 = vcombine.low %v782, %v783
        %v798 = vcombine.low %v784, %v785
        %v799 = vcombine.low %v786, %v787
        %v804 = vpack.c.bf16 %v797, %v796
        %v805 = vpack.c.bf16 %v799, %v798
        %v806 = vld [vmem:[#allocation10] sm:$0xff]
        %v807 = vld [vmem:[#allocation10 + $0x8] sm:$0xff]
        %v808 = vld [vmem:[#allocation10 + $0x10] sm:$0xff]
        %v809 = vld [vmem:[#allocation10 + $0x18] sm:$0xff]
        %v810 = vpack.c.bf16 %v807, %v806
        %v811 = vpack.c.bf16 %v809, %v808
        %v812 = vld [vmem:[%s8] sm:$0x1]
        %v814 = vlaneseq
        %v815 = vshrl.u32 %v814, 7
        %v816 = vsub.s32 0, %v815
        %v817 = vrot.slane %v812, %v816
        %v820 = vsel %vm644, %v804, 0
        %v823 = vsel %vm644, %v805, 0
        %825 = vmatprep.subr.bf16.mxu0 0
        %826 = vmatpush1.bf16.msra.mxu0 %v810
        %827 = vmatprep.subr.bf16.mxu0 0
        %828 = vmatpush1.bf16.msra.mxu0 %v811
        %829 = vmatprep.subr.bf16.mxu0 0
        %830 = vmatpush1.bf16.msra.mxu0 0
        %831 = vmatprep.subr.bf16.mxu0 0
        %832 = vmatpush1.bf16.msra.mxu0 0
        %833 = vmatprep.subr.bf16.mxu0 0
        %834 = vmatpush1.bf16.msra.mxu0 0
        %835 = vmatprep.subr.bf16.mxu0 0
        %836 = vmatpush1.bf16.msra.mxu0 0
        %837 = vmatprep.subr.bf16.mxu0 0
        %838 = vmatpush1.bf16.msra.mxu0 0
        %839 = vmatprep.subr.bf16.mxu0 0
        %840 = vmatpush1.bf16.msra.mxu0 0
        %841 = vmatprep.subr.bf16.mxu0 0
        %842 = vmatpush1.bf16.msra.mxu0 0
        %843 = vmatprep.subr.bf16.mxu0 0
        %844 = vmatpush1.bf16.msra.mxu0 0
        %845 = vmatprep.subr.bf16.mxu0 0
        %846 = vmatpush1.bf16.msra.mxu0 0
        %847 = vmatprep.subr.bf16.mxu0 0
        %848 = vmatpush1.bf16.msra.mxu0 0
        %849 = vmatprep.subr.bf16.mxu0 0
        %850 = vmatpush1.bf16.msra.mxu0 0
        %851 = vmatprep.subr.bf16.mxu0 0
        %852 = vmatpush1.bf16.msra.mxu0 0
        %853 = vmatprep.subr.bf16.mxu0 0
        %854 = vmatpush1.bf16.msra.mxu0 0
        %855 = vmatprep.subr.bf16.mxu0 0
        %856 = vmatpush1.bf16.msra.mxu0 0
        %857 = vmatprep.mubr.bf16.mxu0 0
        %858 = vmatmul.mubr.bf16.gmra.mrb[0].mxu0 %v820
        %v859 = vpop.f32.mrb[0].mxu0
        %v860 = vadd.f32 %v817, %v859
        %v861 = vpop.f32.mrb[0].mxu0
        %v862 = vpop.f32.mrb[0].mxu0
        %v863 = vadd.f32 %v817, %v862
        %v864 = vpop.f32.mrb[0].mxu0
        %865 = vmatprep.mubr.bf16.mxu0 0
        %866 = vmatmul.mubr.bf16.gmra.mrb[0].mxu0 %v823
        %v867 = vpop.f32.mrb[0].mxu0
        %v868 = vadd.f32 %v817, %v867
        %v869 = vpop.f32.mrb[0].mxu0
        %v870 = vpop.f32.mrb[0].mxu0
        %v871 = vadd.f32 %v817, %v870
        %v872 = vpop.f32.mrb[0].mxu0
        %873 = vdwg.mxu0
        %v878 = vcombine.high %v860, %v860
        %v879 = vcombine.high %v863, %v863
        %v880 = vcombine.high %v868, %v868
        %v881 = vcombine.high %v871, %v871
        %v886 = vcombine.low %v860, %v863
        %v888 = vunpack.c.l.s4 1983009808
        %v889 = vunpack.c.0.s8 %v888
        %v890 = vlaneseq
        %v891 = vshrl.u32 %v890, 7
        %v892 = vsub.s32 %v889, %v891
        %v893 = vrot.slane %v886, %v892
        %v894 = vcombine.low %v878, %v879
        %v896 = vunpack.c.l.s4 1983009808
        %v897 = vunpack.c.0.s8 %v896
        %v898 = vlaneseq
        %v899 = vshrl.u32 %v898, 7
        %v900 = vsub.s32 %v897, %v899
        %v901 = vrot.slane %v894, %v900
        %v902 = vcombine.low %v893, %v901
        %v903 = vcombine.high %v893, %v901
        %v905 = vunpack.c.l.s4 1934713408
        %v906 = vunpack.c.0.s8 %v905
        %v907 = vlaneseq
        %v908 = vshrl.u32 %v907, 7
        %v909 = vsub.s32 %v906, %v908
        %v910 = vrot.slane %v902, %v909
        %v912 = vunpack.c.l.s4 1934713408
        %v913 = vunpack.c.0.s8 %v912
        %v914 = vlaneseq
        %v915 = vshrl.u32 %v914, 7
        %v916 = vsub.s32 %v913, %v915
        %v917 = vrot.slane %v903, %v916
        %v918 = vcombine.high %v910, 0.0
        %v919 = vcombine.high %v917, 0.0
        %v920 = vcombine.low %v868, %v871
        %v922 = vunpack.c.l.s4 1983009808
        %v923 = vunpack.c.0.s8 %v922
        %v924 = vlaneseq
        %v925 = vshrl.u32 %v924, 7
        %v926 = vsub.s32 %v923, %v925
        %v927 = vrot.slane %v920, %v926
        %v928 = vcombine.low %v880, %v881
        %v930 = vunpack.c.l.s4 1983009808
        %v931 = vunpack.c.0.s8 %v930
        %v932 = vlaneseq
        %v933 = vshrl.u32 %v932, 7
        %v934 = vsub.s32 %v931, %v933
        %v935 = vrot.slane %v928, %v934
        %v936 = vcombine.low %v927, %v935
        %v937 = vcombine.high %v927, %v935
        %v939 = vunpack.c.l.s4 1934713408
        %v940 = vunpack.c.0.s8 %v939
        %v941 = vlaneseq
        %v942 = vshrl.u32 %v941, 7
        %v943 = vsub.s32 %v940, %v942
        %v944 = vrot.slane %v936, %v943
        %v946 = vunpack.c.l.s4 1934713408
        %v947 = vunpack.c.0.s8 %v946
        %v948 = vlaneseq
        %v949 = vshrl.u32 %v948, 7
        %v950 = vsub.s32 %v947, %v949
        %v951 = vrot.slane %v937, %v950
        %v952 = vcombine.high %v944, 0.0
        %v953 = vcombine.high %v951, 0.0
        %v954 = vld [vmem:[%s531] sm:$0xf]
        %v955 = vld [vmem:[%s531 + $0x4] sm:$0xf]
        %v956 = vld [vmem:[%s531 + $0x8] sm:$0xf]
        %v957 = vld [vmem:[%s531 + $0xc] sm:$0xf]
        %v958 = vld [vmem:[%s531 + $0x10] sm:$0xf]
        %v959 = vld [vmem:[%s531 + $0x14] sm:$0xf]
        %v960 = vld [vmem:[%s531 + $0x18] sm:$0xf]
        %v961 = vld [vmem:[%s531 + $0x1c] sm:$0xf]
        %v970 = vcombine.low %v954, %v955
        %v971 = vcombine.low %v956, %v957
        %v972 = vcombine.low %v958, %v959
        %v973 = vcombine.low %v960, %v961
        %v978 = vpack.c.bf16 %v971, %v970
        %v979 = vpack.c.bf16 %v973, %v972
        %v980 = vld [vmem:[#allocation11] sm:$0xff]
        %v981 = vld [vmem:[#allocation11 + $0x8] sm:$0xff]
        %v982 = vld [vmem:[#allocation11 + $0x10] sm:$0xff]
        %v983 = vld [vmem:[#allocation11 + $0x18] sm:$0xff]
        %v984 = vpack.c.bf16 %v981, %v980
        %v985 = vpack.c.bf16 %v983, %v982
        %v986 = vld [vmem:[%s9] sm:$0x1]
        %v988 = vlaneseq
        %v989 = vshrl.u32 %v988, 7
        %v990 = vsub.s32 0, %v989
        %v991 = vrot.slane %v986, %v990
        %v994 = vsel %vm644, %v978, 0
        %v997 = vsel %vm644, %v979, 0
        %999 = vmatprep.subr.bf16.mxu0 0
        %1000 = vmatpush1.bf16.msra.mxu0 %v984
        %1001 = vmatprep.subr.bf16.mxu0 0
        %1002 = vmatpush1.bf16.msra.mxu0 %v985
        %1003 = vmatprep.subr.bf16.mxu0 0
        %1004 = vmatpush1.bf16.msra.mxu0 0
        %1005 = vmatprep.subr.bf16.mxu0 0
        %1006 = vmatpush1.bf16.msra.mxu0 0
        %1007 = vmatprep.subr.bf16.mxu0 0
        %1008 = vmatpush1.bf16.msra.mxu0 0
        %1009 = vmatprep.subr.bf16.mxu0 0
        %1010 = vmatpush1.bf16.msra.mxu0 0
        %1011 = vmatprep.subr.bf16.mxu0 0
        %1012 = vmatpush1.bf16.msra.mxu0 0
        %1013 = vmatprep.subr.bf16.mxu0 0
        %1014 = vmatpush1.bf16.msra.mxu0 0
        %1015 = vmatprep.subr.bf16.mxu0 0
        %1016 = vmatpush1.bf16.msra.mxu0 0
        %1017 = vmatprep.subr.bf16.mxu0 0
        %1018 = vmatpush1.bf16.msra.mxu0 0
        %1019 = vmatprep.subr.bf16.mxu0 0
        %1020 = vmatpush1.bf16.msra.mxu0 0
        %1021 = vmatprep.subr.bf16.mxu0 0
        %1022 = vmatpush1.bf16.msra.mxu0 0
        %1023 = vmatprep.subr.bf16.mxu0 0
        %1024 = vmatpush1.bf16.msra.mxu0 0
        %1025 = vmatprep.subr.bf16.mxu0 0
        %1026 = vmatpush1.bf16.msra.mxu0 0
        %1027 = vmatprep.subr.bf16.mxu0 0
        %1028 = vmatpush1.bf16.msra.mxu0 0
        %1029 = vmatprep.subr.bf16.mxu0 0
        %1030 = vmatpush1.bf16.msra.mxu0 0
        %1031 = vmatprep.mubr.bf16.mxu0 0
        %1032 = vmatmul.mubr.bf16.gmra.mrb[0].mxu0 %v994
        %v1033 = vpop.f32.mrb[0].mxu0
        %v1034 = vadd.f32 %v991, %v1033
        %v1035 = vpop.f32.mrb[0].mxu0
        %v1036 = vpop.f32.mrb[0].mxu0
        %v1037 = vadd.f32 %v991, %v1036
        %v1038 = vpop.f32.mrb[0].mxu0
        %1039 = vmatprep.mubr.bf16.mxu0 0
        %1040 = vmatmul.mubr.bf16.gmra.mrb[0].mxu0 %v997
        %v1041 = vpop.f32.mrb[0].mxu0
        %v1042 = vadd.f32 %v991, %v1041
        %v1043 = vpop.f32.mrb[0].mxu0
        %v1044 = vpop.f32.mrb[0].mxu0
        %v1045 = vadd.f32 %v991, %v1044
        %v1046 = vpop.f32.mrb[0].mxu0
        %1047 = vdwg.mxu0
        %v1052 = vcombine.high %v1034, %v1034
        %v1053 = vcombine.high %v1037, %v1037
        %v1054 = vcombine.high %v1042, %v1042
        %v1055 = vcombine.high %v1045, %v1045
        %v1060 = vcombine.low %v1034, %v1037
        %v1062 = vunpack.c.l.s4 1983009808
        %v1063 = vunpack.c.0.s8 %v1062
        %v1064 = vlaneseq
        %v1065 = vshrl.u32 %v1064, 7
        %v1066 = vsub.s32 %v1063, %v1065
        %v1067 = vrot.slane %v1060, %v1066
        %v1068 = vcombine.low %v1052, %v1053
        %v1070 = vunpack.c.l.s4 1983009808
        %v1071 = vunpack.c.0.s8 %v1070
        %v1072 = vlaneseq
        %v1073 = vshrl.u32 %v1072, 7
        %v1074 = vsub.s32 %v1071, %v1073
        %v1075 = vrot.slane %v1068, %v1074
        %v1076 = vcombine.low %v1067, %v1075
        %v1077 = vcombine.high %v1067, %v1075
        %v1079 = vunpack.c.l.s4 1934713408
        %v1080 = vunpack.c.0.s8 %v1079
        %v1081 = vlaneseq
        %v1082 = vshrl.u32 %v1081, 7
        %v1083 = vsub.s32 %v1080, %v1082
        %v1084 = vrot.slane %v1076, %v1083
        %v1086 = vunpack.c.l.s4 1934713408
        %v1087 = vunpack.c.0.s8 %v1086
        %v1088 = vlaneseq
        %v1089 = vshrl.u32 %v1088, 7
        %v1090 = vsub.s32 %v1087, %v1089
        %v1091 = vrot.slane %v1077, %v1090
        %v1092 = vcombine.high %v1084, 0.0
        %v1093 = vcombine.high %v1091, 0.0
        %v1094 = vcombine.low %v1042, %v1045
        %v1096 = vunpack.c.l.s4 1983009808
        %v1097 = vunpack.c.0.s8 %v1096
        %v1098 = vlaneseq
        %v1099 = vshrl.u32 %v1098, 7
        %v1100 = vsub.s32 %v1097, %v1099
        %v1101 = vrot.slane %v1094, %v1100
        %v1102 = vcombine.low %v1054, %v1055
        %v1104 = vunpack.c.l.s4 1983009808
        %v1105 = vunpack.c.0.s8 %v1104
        %v1106 = vlaneseq
        %v1107 = vshrl.u32 %v1106, 7
        %v1108 = vsub.s32 %v1105, %v1107
        %v1109 = vrot.slane %v1102, %v1108
        %v1110 = vcombine.low %v1101, %v1109
        %v1111 = vcombine.high %v1101, %v1109
        %v1113 = vunpack.c.l.s4 1934713408
        %v1114 = vunpack.c.0.s8 %v1113
        %v1115 = vlaneseq
        %v1116 = vshrl.u32 %v1115, 7
        %v1117 = vsub.s32 %v1114, %v1116
        %v1118 = vrot.slane %v1110, %v1117
        %v1120 = vunpack.c.l.s4 1934713408
        %v1121 = vunpack.c.0.s8 %v1120
        %v1122 = vlaneseq
        %v1123 = vshrl.u32 %v1122, 7
        %v1124 = vsub.s32 %v1121, %v1123
        %v1125 = vrot.slane %v1111, %v1124
        %v1126 = vcombine.high %v1118, 0.0
        %v1127 = vcombine.high %v1125, 0.0
        %v1136 = vcombine.low %v736, %v770
        %v1137 = vcombine.low %v744, %v778
        %v1138 = vcombine.low %v743, %v777
        %v1139 = vcombine.low %v745, %v779
        %v1144 = vpack.c.bf16 %v1136, %v1136
        %v1145 = vpack.c.bf16 %v1137, %v1137
        %v1146 = vpack.c.bf16 %v1138, %v1138
        %v1147 = vpack.c.bf16 %v1139, %v1139
        %v1156 = vcombine.low %v910, %v944
        %v1157 = vcombine.low %v918, %v952
        %v1158 = vcombine.low %v917, %v951
        %v1159 = vcombine.low %v919, %v953
        %v1164 = vpack.c.bf16 %v1156, %v1156
        %v1165 = vpack.c.bf16 %v1157, %v1157
        %v1166 = vpack.c.bf16 %v1158, %v1158
        %v1167 = vpack.c.bf16 %v1159, %v1159
        %v1169 = vsel %vm644, %v1144, 0
        %v1172 = vsel %vm644, %v1164, 0
        %1174 = vmatprep.subr.bf16.mxu0 0
        %1175 = vmatpush1.bf16.xpose.msra.mxu0 %v1172
        %1176 = vmatprep.subr.bf16.mxu0 0
        %1177 = vmatpush1.bf16.xpose.msra.mxu0 0
        %1178 = vmatprep.subr.bf16.mxu0 0
        %1179 = vmatpush1.bf16.xpose.msra.mxu0 0
        %1180 = vmatprep.subr.bf16.mxu0 0
        %1181 = vmatpush1.bf16.xpose.msra.mxu0 0
        %1182 = vmatprep.subr.bf16.mxu0 0
        %1183 = vmatpush1.bf16.xpose.msra.mxu0 0
        %1184 = vmatprep.subr.bf16.mxu0 0
        %1185 = vmatpush1.bf16.xpose.msra.mxu0 0
        %1186 = vmatprep.subr.bf16.mxu0 0
        %1187 = vmatpush1.bf16.xpose.msra.mxu0 0
        %1188 = vmatprep.subr.bf16.mxu0 0
        %1189 = vmatpush1.bf16.xpose.msra.mxu0 0
        %1190 = vmatprep.subr.bf16.mxu0 0
        %1191 = vmatpush1.bf16.xpose.msra.mxu0 0
        %1192 = vmatprep.subr.bf16.mxu0 0
        %1193 = vmatpush1.bf16.xpose.msra.mxu0 0
        %1194 = vmatprep.subr.bf16.mxu0 0
        %1195 = vmatpush1.bf16.xpose.msra.mxu0 0
        %1196 = vmatprep.subr.bf16.mxu0 0
        %1197 = vmatpush1.bf16.xpose.msra.mxu0 0
        %1198 = vmatprep.subr.bf16.mxu0 0
        %1199 = vmatpush1.bf16.xpose.msra.mxu0 0
        %1200 = vmatprep.subr.bf16.mxu0 0
        %1201 = vmatpush1.bf16.xpose.msra.mxu0 0
        %1202 = vmatprep.subr.bf16.mxu0 0
        %1203 = vmatpush1.bf16.xpose.msra.mxu0 0
        %1204 = vmatprep.subr.bf16.mxu0 0
        %1205 = vmatpush1.bf16.xpose.msra.mxu0 0
        %1206 = vmatprep.mubr.bf16.mxu0 0
        %1207 = vmatmul.mubr.bf16.gmra.mrb[0].mxu0 %v1169
        %v1208 = vpop.f32.mrb[0].mxu0
        %v1209 = vadd.f32 0.0, %v1208
        %v1210 = vpop.f32.mrb[0].mxu0
        %v1211 = vpop.f32.mrb[0].mxu0
        %v1212 = vpop.f32.mrb[0].mxu0
        %1213 = vdwg.mxu0
        %v1215 = vsel %vm644, %v1145, 0
        %v1218 = vsel %vm644, %v1165, 0
        %1220 = vmatprep.subr.bf16.mxu0 0
        %1221 = vmatpush1.bf16.xpose.msra.mxu0 %v1218
        %1222 = vmatprep.subr.bf16.mxu0 0
        %1223 = vmatpush1.bf16.xpose.msra.mxu0 0
        %1224 = vmatprep.subr.bf16.mxu0 0
        %1225 = vmatpush1.bf16.xpose.msra.mxu0 0
        %1226 = vmatprep.subr.bf16.mxu0 0
        %1227 = vmatpush1.bf16.xpose.msra.mxu0 0
        %1228 = vmatprep.subr.bf16.mxu0 0
        %1229 = vmatpush1.bf16.xpose.msra.mxu0 0
        %1230 = vmatprep.subr.bf16.mxu0 0
        %1231 = vmatpush1.bf16.xpose.msra.mxu0 0
        %1232 = vmatprep.subr.bf16.mxu0 0
        %1233 = vmatpush1.bf16.xpose.msra.mxu0 0
        %1234 = vmatprep.subr.bf16.mxu0 0
        %1235 = vmatpush1.bf16.xpose.msra.mxu0 0
        %1236 = vmatprep.subr.bf16.mxu0 0
        %1237 = vmatpush1.bf16.xpose.msra.mxu0 0
        %1238 = vmatprep.subr.bf16.mxu0 0
        %1239 = vmatpush1.bf16.xpose.msra.mxu0 0
        %1240 = vmatprep.subr.bf16.mxu0 0
        %1241 = vmatpush1.bf16.xpose.msra.mxu0 0
        %1242 = vmatprep.subr.bf16.mxu0 0
        %1243 = vmatpush1.bf16.xpose.msra.mxu0 0
        %1244 = vmatprep.subr.bf16.mxu0 0
        %1245 = vmatpush1.bf16.xpose.msra.mxu0 0
        %1246 = vmatprep.subr.bf16.mxu0 0
        %1247 = vmatpush1.bf16.xpose.msra.mxu0 0
        %1248 = vmatprep.subr.bf16.mxu0 0
        %1249 = vmatpush1.bf16.xpose.msra.mxu0 0
        %1250 = vmatprep.subr.bf16.mxu0 0
        %1251 = vmatpush1.bf16.xpose.msra.mxu0 0
        %1252 = vmatprep.mubr.bf16.mxu0 0
        %1253 = vmatmul.mubr.bf16.gmra.mrb[0].mxu0 %v1215
        %v1254 = vpop.f32.mrb[0].mxu0
        %v1255 = vadd.f32 0.0, %v1254
        %v1256 = vpop.f32.mrb[0].mxu0
        %v1257 = vpop.f32.mrb[0].mxu0
        %v1258 = vpop.f32.mrb[0].mxu0
        %1259 = vdwg.mxu0
        %v1261 = vsel %vm644, %v1146, 0
        %v1264 = vsel %vm644, %v1166, 0
        %1266 = vmatprep.subr.bf16.mxu0 0
        %1267 = vmatpush1.bf16.xpose.msra.mxu0 %v1264
        %1268 = vmatprep.subr.bf16.mxu0 0
        %1269 = vmatpush1.bf16.xpose.msra.mxu0 0
        %1270 = vmatprep.subr.bf16.mxu0 0
        %1271 = vmatpush1.bf16.xpose.msra.mxu0 0
        %1272 = vmatprep.subr.bf16.mxu0 0
        %1273 = vmatpush1.bf16.xpose.msra.mxu0 0
        %1274 = vmatprep.subr.bf16.mxu0 0
        %1275 = vmatpush1.bf16.xpose.msra.mxu0 0
        %1276 = vmatprep.subr.bf16.mxu0 0
        %1277 = vmatpush1.bf16.xpose.msra.mxu0 0
        %1278 = vmatprep.subr.bf16.mxu0 0
        %1279 = vmatpush1.bf16.xpose.msra.mxu0 0
        %1280 = vmatprep.subr.bf16.mxu0 0
        %1281 = vmatpush1.bf16.xpose.msra.mxu0 0
        %1282 = vmatprep.subr.bf16.mxu0 0
        %1283 = vmatpush1.bf16.xpose.msra.mxu0 0
        %1284 = vmatprep.subr.bf16.mxu0 0
        %1285 = vmatpush1.bf16.xpose.msra.mxu0 0
        %1286 = vmatprep.subr.bf16.mxu0 0
        %1287 = vmatpush1.bf16.xpose.msra.mxu0 0
        %1288 = vmatprep.subr.bf16.mxu0 0
        %1289 = vmatpush1.bf16.xpose.msra.mxu0 0
        %1290 = vmatprep.subr.bf16.mxu0 0
        %1291 = vmatpush1.bf16.xpose.msra.mxu0 0
        %1292 = vmatprep.subr.bf16.mxu0 0
        %1293 = vmatpush1.bf16.xpose.msra.mxu0 0
        %1294 = vmatprep.subr.bf16.mxu0 0
        %1295 = vmatpush1.bf16.xpose.msra.mxu0 0
        %1296 = vmatprep.subr.bf16.mxu0 0
        %1297 = vmatpush1.bf16.xpose.msra.mxu0 0
        %1298 = vmatprep.mubr.bf16.mxu0 0
        %1299 = vmatmul.mubr.bf16.gmra.mrb[0].mxu0 %v1261
        %v1300 = vpop.f32.mrb[0].mxu0
        %v1301 = vadd.f32 0.0, %v1300
        %v1302 = vpop.f32.mrb[0].mxu0
        %v1303 = vpop.f32.mrb[0].mxu0
        %v1304 = vpop.f32.mrb[0].mxu0
        %1305 = vdwg.mxu0
        %v1307 = vsel %vm644, %v1147, 0
        %v1310 = vsel %vm644, %v1167, 0
        %1312 = vmatprep.subr.bf16.mxu0 0
        %1313 = vmatpush1.bf16.xpose.msra.mxu0 %v1310
        %1314 = vmatprep.subr.bf16.mxu0 0
        %1315 = vmatpush1.bf16.xpose.msra.mxu0 0
        %1316 = vmatprep.subr.bf16.mxu0 0
        %1317 = vmatpush1.bf16.xpose.msra.mxu0 0
        %1318 = vmatprep.subr.bf16.mxu0 0
        %1319 = vmatpush1.bf16.xpose.msra.mxu0 0
        %1320 = vmatprep.subr.bf16.mxu0 0
        %1321 = vmatpush1.bf16.xpose.msra.mxu0 0
        %1322 = vmatprep.subr.bf16.mxu0 0
        %1323 = vmatpush1.bf16.xpose.msra.mxu0 0
        %1324 = vmatprep.subr.bf16.mxu0 0
        %1325 = vmatpush1.bf16.xpose.msra.mxu0 0
        %1326 = vmatprep.subr.bf16.mxu0 0
        %1327 = vmatpush1.bf16.xpose.msra.mxu0 0
        %1328 = vmatprep.subr.bf16.mxu0 0
        %1329 = vmatpush1.bf16.xpose.msra.mxu0 0
        %1330 = vmatprep.subr.bf16.mxu0 0
        %1331 = vmatpush1.bf16.xpose.msra.mxu0 0
        %1332 = vmatprep.subr.bf16.mxu0 0
        %1333 = vmatpush1.bf16.xpose.msra.mxu0 0
        %1334 = vmatprep.subr.bf16.mxu0 0
        %1335 = vmatpush1.bf16.xpose.msra.mxu0 0
        %1336 = vmatprep.subr.bf16.mxu0 0
        %1337 = vmatpush1.bf16.xpose.msra.mxu0 0
        %1338 = vmatprep.subr.bf16.mxu0 0
        %1339 = vmatpush1.bf16.xpose.msra.mxu0 0
        %1340 = vmatprep.subr.bf16.mxu0 0
        %1341 = vmatpush1.bf16.xpose.msra.mxu0 0
        %1342 = vmatprep.subr.bf16.mxu0 0
        %1343 = vmatpush1.bf16.xpose.msra.mxu0 0
        %1344 = vmatprep.mubr.bf16.mxu0 0
        %1345 = vmatmul.mubr.bf16.gmra.mrb[0].mxu0 %v1307
        %v1346 = vpop.f32.mrb[0].mxu0
        %v1347 = vadd.f32 0.0, %v1346
        %v1348 = vpop.f32.mrb[0].mxu0
        %v1349 = vpop.f32.mrb[0].mxu0
        %v1350 = vpop.f32.mrb[0].mxu0
        %1351 = vdwg.mxu0
        %v1352 = vmul.f32 %v1209, 0.17677669
        %v1353 = vmul.f32 %v1255, 0.17677669
        %v1354 = vmul.f32 %v1301, 0.17677669
        %v1355 = vmul.f32 %v1347, 0.17677669
        %vm1356 = vcmask 64512
        %v1357 = vsel %vm1356, %v1352, -inf
        %1358 = vmax.xlane.f32.xlu0 %v1357
        %v1359 = vpop.xlane.xlu0 %1358
        %v1360 = vsel %vm1356, %v1353, -inf
        %1361 = vmax.xlane.f32.xlu0 %v1360
        %v1362 = vpop.xlane.xlu0 %1361
        %v1363 = vsel %vm1356, %v1354, -inf
        %1364 = vmax.xlane.f32.xlu0 %v1363
        %v1365 = vpop.xlane.xlu0 %1364
        %v1366 = vsel %vm1356, %v1355, -inf
        %1367 = vmax.xlane.f32.xlu0 %v1366
        %v1368 = vpop.xlane.xlu0 %1367
        %v1369 = vsub.f32 %v1352, %v1359
        %v1370 = vsub.f32 %v1353, %v1362
        %v1371 = vsub.f32 %v1354, %v1365
        %v1372 = vsub.f32 %v1355, %v1368
        %v1373 = vmul.f32 %v1369, 1.442695
        %v1374 = vpow.pop %v1373
        %v1375 = vmul.f32 %v1370, 1.442695
        %v1376 = vpow.pop %v1375
        %v1377 = vmul.f32 %v1371, 1.442695
        %v1378 = vpow.pop %v1377
        %v1379 = vmul.f32 %v1372, 1.442695
        %v1380 = vpow.pop %v1379
        %v1381 = vsel %vm1356, %v1374, 0.0
        %1382 = vadd.xlane.f32.xlu0 %v1381
        %v1383 = vpop.xlane.xlu0 %1382
        %v1384 = vsel %vm1356, %v1376, 0.0
        %1385 = vadd.xlane.f32.xlu0 %v1384
        %v1386 = vpop.xlane.xlu0 %1385
        %v1387 = vsel %vm1356, %v1378, 0.0
        %1388 = vadd.xlane.f32.xlu0 %v1387
        %v1389 = vpop.xlane.xlu0 %1388
        %v1390 = vsel %vm1356, %v1380, 0.0
        %1391 = vadd.xlane.f32.xlu0 %v1390
        %v1392 = vpop.xlane.xlu0 %1391
        %v1393 = vrcp.pop %v1383
        %v1394 = vrcp.pop %v1386
        %v1395 = vrcp.pop %v1389
        %v1396 = vrcp.pop %v1392
        %v1397 = vmul.f32 %v1374, %v1393
        %v1398 = vmul.f32 %v1376, %v1394
        %v1399 = vmul.f32 %v1378, %v1395
        %v1400 = vmul.f32 %v1380, %v1396
        %1401 = vst.msk [vmem:[%s602] sm:$0xff] %vm1356, %v1397
        %1402 = vst.msk [vmem:[%s602 + $0x8] sm:$0xff] %vm1356, %v1398
        %1403 = vst.msk [vmem:[%s602 + $0x10] sm:$0xff] %vm1356, %v1399
        %1404 = vst.msk [vmem:[%s602 + $0x18] sm:$0xff] %vm1356, %v1400
        %v1405 = vpack.c.bf16 %v1397, %v1397
        %v1406 = vpack.c.bf16 %v1398, %v1398
        %v1407 = vpack.c.bf16 %v1399, %v1399
        %v1408 = vpack.c.bf16 %v1400, %v1400
        %v1417 = vcombine.low %v1084, %v1118
        %v1418 = vcombine.low %v1092, %v1126
        %v1419 = vcombine.low %v1091, %v1125
        %v1420 = vcombine.low %v1093, %v1127
        %v1425 = vpack.c.bf16 %v1417, %v1417
        %v1426 = vpack.c.bf16 %v1418, %v1418
        %v1427 = vpack.c.bf16 %v1419, %v1419
        %v1428 = vpack.c.bf16 %v1420, %v1420
        %v1430 = vsel %vm1356, %v1405, 0
        %vm1432 = vcmask 1043456
        %v1434 = vsel %vm1432, %v1425, 0
        %1436 = vmatprep.subr.bf16.mxu0 0
        %1437 = vmatpush1.bf16.msra.mxu0 %v1434
        %1438 = vmatprep.subr.bf16.mxu0 0
        %1439 = vmatpush1.bf16.msra.mxu0 0
        %1440 = vmatprep.subr.bf16.mxu0 0
        %1441 = vmatpush1.bf16.msra.mxu0 0
        %1442 = vmatprep.subr.bf16.mxu0 0
        %1443 = vmatpush1.bf16.msra.mxu0 0
        %1444 = vmatprep.subr.bf16.mxu0 0
        %1445 = vmatpush1.bf16.msra.mxu0 0
        %1446 = vmatprep.subr.bf16.mxu0 0
        %1447 = vmatpush1.bf16.msra.mxu0 0
        %1448 = vmatprep.subr.bf16.mxu0 0
        %1449 = vmatpush1.bf16.msra.mxu0 0
        %1450 = vmatprep.subr.bf16.mxu0 0
        %1451 = vmatpush1.bf16.msra.mxu0 0
        %1452 = vmatprep.subr.bf16.mxu0 0
        %1453 = vmatpush1.bf16.msra.mxu0 0
        %1454 = vmatprep.subr.bf16.mxu0 0
        %1455 = vmatpush1.bf16.msra.mxu0 0
        %1456 = vmatprep.subr.bf16.mxu0 0
        %1457 = vmatpush1.bf16.msra.mxu0 0
        %1458 = vmatprep.subr.bf16.mxu0 0
        %1459 = vmatpush1.bf16.msra.mxu0 0
        %1460 = vmatprep.subr.bf16.mxu0 0
        %1461 = vmatpush1.bf16.msra.mxu0 0
        %1462 = vmatprep.subr.bf16.mxu0 0
        %1463 = vmatpush1.bf16.msra.mxu0 0
        %1464 = vmatprep.subr.bf16.mxu0 0
        %1465 = vmatpush1.bf16.msra.mxu0 0
        %1466 = vmatprep.subr.bf16.mxu0 0
        %1467 = vmatpush1.bf16.msra.mxu0 0
        %1468 = vmatprep.mubr.bf16.mxu0 0
        %1469 = vmatmul.mubr.bf16.gmra.mrb[0].mxu0 %v1430
        %v1470 = vpop.f32.mrb[0].mxu0
        %v1471 = vadd.f32 0.0, %v1470
        %v1472 = vpop.f32.mrb[0].mxu0
        %v1473 = vpop.f32.mrb[0].mxu0
        %v1474 = vpop.f32.mrb[0].mxu0
        %1475 = vdwg.mxu0
        %v1477 = vsel %vm1356, %v1406, 0
        %v1480 = vsel %vm1432, %v1426, 0
        %1482 = vmatprep.subr.bf16.mxu0 0
        %1483 = vmatpush1.bf16.msra.mxu0 %v1480
        %1484 = vmatprep.subr.bf16.mxu0 0
        %1485 = vmatpush1.bf16.msra.mxu0 0
        %1486 = vmatprep.subr.bf16.mxu0 0
        %1487 = vmatpush1.bf16.msra.mxu0 0
        %1488 = vmatprep.subr.bf16.mxu0 0
        %1489 = vmatpush1.bf16.msra.mxu0 0
        %1490 = vmatprep.subr.bf16.mxu0 0
        %1491 = vmatpush1.bf16.msra.mxu0 0
        %1492 = vmatprep.subr.bf16.mxu0 0
        %1493 = vmatpush1.bf16.msra.mxu0 0
        %1494 = vmatprep.subr.bf16.mxu0 0
        %1495 = vmatpush1.bf16.msra.mxu0 0
        %1496 = vmatprep.subr.bf16.mxu0 0
        %1497 = vmatpush1.bf16.msra.mxu0 0
        %1498 = vmatprep.subr.bf16.mxu0 0
        %1499 = vmatpush1.bf16.msra.mxu0 0
        %1500 = vmatprep.subr.bf16.mxu0 0
        %1501 = vmatpush1.bf16.msra.mxu0 0
        %1502 = vmatprep.subr.bf16.mxu0 0
        %1503 = vmatpush1.bf16.msra.mxu0 0
        %1504 = vmatprep.subr.bf16.mxu0 0
        %1505 = vmatpush1.bf16.msra.mxu0 0
        %1506 = vmatprep.subr.bf16.mxu0 0
        %1507 = vmatpush1.bf16.msra.mxu0 0
        %1508 = vmatprep.subr.bf16.mxu0 0
        %1509 = vmatpush1.bf16.msra.mxu0 0
        %1510 = vmatprep.subr.bf16.mxu0 0
        %1511 = vmatpush1.bf16.msra.mxu0 0
        %1512 = vmatprep.subr.bf16.mxu0 0
        %1513 = vmatpush1.bf16.msra.mxu0 0
        %1514 = vmatprep.mubr.bf16.mxu0 0
        %1515 = vmatmul.mubr.bf16.gmra.mrb[0].mxu0 %v1477
        %v1516 = vpop.f32.mrb[0].mxu0
        %v1517 = vadd.f32 0.0, %v1516
        %v1518 = vpop.f32.mrb[0].mxu0
        %v1519 = vpop.f32.mrb[0].mxu0
        %v1520 = vpop.f32.mrb[0].mxu0
        %1521 = vdwg.mxu0
        %v1523 = vsel %vm1356, %v1407, 0
        %v1526 = vsel %vm1432, %v1427, 0
        %1528 = vmatprep.subr.bf16.mxu0 0
        %1529 = vmatpush1.bf16.msra.mxu0 %v1526
        %1530 = vmatprep.subr.bf16.mxu0 0
        %1531 = vmatpush1.bf16.msra.mxu0 0
        %1532 = vmatprep.subr.bf16.mxu0 0
        %1533 = vmatpush1.bf16.msra.mxu0 0
        %1534 = vmatprep.subr.bf16.mxu0 0
        %1535 = vmatpush1.bf16.msra.mxu0 0
        %1536 = vmatprep.subr.bf16.mxu0 0
        %1537 = vmatpush1.bf16.msra.mxu0 0
        %1538 = vmatprep.subr.bf16.mxu0 0
        %1539 = vmatpush1.bf16.msra.mxu0 0
        %1540 = vmatprep.subr.bf16.mxu0 0
        %1541 = vmatpush1.bf16.msra.mxu0 0
        %1542 = vmatprep.subr.bf16.mxu0 0
        %1543 = vmatpush1.bf16.msra.mxu0 0
        %1544 = vmatprep.subr.bf16.mxu0 0
        %1545 = vmatpush1.bf16.msra.mxu0 0
        %1546 = vmatprep.subr.bf16.mxu0 0
        %1547 = vmatpush1.bf16.msra.mxu0 0
        %1548 = vmatprep.subr.bf16.mxu0 0
        %1549 = vmatpush1.bf16.msra.mxu0 0
        %1550 = vmatprep.subr.bf16.mxu0 0
        %1551 = vmatpush1.bf16.msra.mxu0 0
        %1552 = vmatprep.subr.bf16.mxu0 0
        %1553 = vmatpush1.bf16.msra.mxu0 0
        %1554 = vmatprep.subr.bf16.mxu0 0
        %1555 = vmatpush1.bf16.msra.mxu0 0
        %1556 = vmatprep.subr.bf16.mxu0 0
        %1557 = vmatpush1.bf16.msra.mxu0 0
        %1558 = vmatprep.subr.bf16.mxu0 0
        %1559 = vmatpush1.bf16.msra.mxu0 0
        %1560 = vmatprep.mubr.bf16.mxu0 0
        %1561 = vmatmul.mubr.bf16.gmra.mrb[0].mxu0 %v1523
        %v1562 = vpop.f32.mrb[0].mxu0
        %v1563 = vadd.f32 0.0, %v1562
        %v1564 = vpop.f32.mrb[0].mxu0
        %v1565 = vpop.f32.mrb[0].mxu0
        %v1566 = vpop.f32.mrb[0].mxu0
        %1567 = vdwg.mxu0
        %v1569 = vsel %vm1356, %v1408, 0
        %v1572 = vsel %vm1432, %v1428, 0
        %1574 = vmatprep.subr.bf16.mxu0 0
        %1575 = vmatpush1.bf16.msra.mxu0 %v1572
        %1576 = vmatprep.subr.bf16.mxu0 0
        %1577 = vmatpush1.bf16.msra.mxu0 0
        %1578 = vmatprep.subr.bf16.mxu0 0
        %1579 = vmatpush1.bf16.msra.mxu0 0
        %1580 = vmatprep.subr.bf16.mxu0 0
        %1581 = vmatpush1.bf16.msra.mxu0 0
        %1582 = vmatprep.subr.bf16.mxu0 0
        %1583 = vmatpush1.bf16.msra.mxu0 0
        %1584 = vmatprep.subr.bf16.mxu0 0
        %1585 = vmatpush1.bf16.msra.mxu0 0
        %1586 = vmatprep.subr.bf16.mxu0 0
        %1587 = vmatpush1.bf16.msra.mxu0 0
        %1588 = vmatprep.subr.bf16.mxu0 0
        %1589 = vmatpush1.bf16.msra.mxu0 0
        %1590 = vmatprep.subr.bf16.mxu0 0
        %1591 = vmatpush1.bf16.msra.mxu0 0
        %1592 = vmatprep.subr.bf16.mxu0 0
        %1593 = vmatpush1.bf16.msra.mxu0 0
        %1594 = vmatprep.subr.bf16.mxu0 0
        %1595 = vmatpush1.bf16.msra.mxu0 0
        %1596 = vmatprep.subr.bf16.mxu0 0
        %1597 = vmatpush1.bf16.msra.mxu0 0
        %1598 = vmatprep.subr.bf16.mxu0 0
        %1599 = vmatpush1.bf16.msra.mxu0 0
        %1600 = vmatprep.subr.bf16.mxu0 0
        %1601 = vmatpush1.bf16.msra.mxu0 0
        %1602 = vmatprep.subr.bf16.mxu0 0
        %1603 = vmatpush1.bf16.msra.mxu0 0
        %1604 = vmatprep.subr.bf16.mxu0 0
        %1605 = vmatpush1.bf16.msra.mxu0 0
        %1606 = vmatprep.mubr.bf16.mxu0 0
        %1607 = vmatmul.mubr.bf16.gmra.mrb[0].mxu0 %v1569
        %v1608 = vpop.f32.mrb[0].mxu0
        %v1609 = vadd.f32 0.0, %v1608
        %v1610 = vpop.f32.mrb[0].mxu0
        %v1611 = vpop.f32.mrb[0].mxu0
        %v1612 = vpop.f32.mrb[0].mxu0
        %1613 = vdwg.mxu0
        %v1614 = vcombine.low %v1471, %v1563
        %v1615 = vcombine.high %v1471, %v1563
        %v1617 = vunpack.c.l.s4 1983009808
        %v1618 = vunpack.c.0.s8 %v1617
        %v1619 = vlaneseq
        %v1620 = vshrl.u32 %v1619, 7
        %v1621 = vsub.s32 %v1618, %v1620
        %v1622 = vrot.slane %v1614, %v1621
        %v1624 = vunpack.c.l.s4 1983009808
        %v1625 = vunpack.c.0.s8 %v1624
        %v1626 = vlaneseq
        %v1627 = vshrl.u32 %v1626, 7
        %v1628 = vsub.s32 %v1625, %v1627
        %v1629 = vrot.slane %v1615, %v1628
        %v1630 = vcombine.low %v1517, %v1609
        %v1631 = vcombine.high %v1517, %v1609
        %v1633 = vunpack.c.l.s4 1983009808
        %v1634 = vunpack.c.0.s8 %v1633
        %v1635 = vlaneseq
        %v1636 = vshrl.u32 %v1635, 7
        %v1637 = vsub.s32 %v1634, %v1636
        %v1638 = vrot.slane %v1630, %v1637
        %v1640 = vunpack.c.l.s4 1983009808
        %v1641 = vunpack.c.0.s8 %v1640
        %v1642 = vlaneseq
        %v1643 = vshrl.u32 %v1642, 7
        %v1644 = vsub.s32 %v1641, %v1643
        %v1645 = vrot.slane %v1631, %v1644
        %v1646 = vcombine.low %v1622, %v1638
        %v1647 = vcombine.high %v1622, %v1638
        %v1649 = vunpack.c.l.s4 1934713408
        %v1650 = vunpack.c.0.s8 %v1649
        %v1651 = vlaneseq
        %v1652 = vshrl.u32 %v1651, 7
        %v1653 = vsub.s32 %v1650, %v1652
        %v1654 = vrot.slane %v1646, %v1653
        %v1656 = vunpack.c.l.s4 1934713408
        %v1657 = vunpack.c.0.s8 %v1656
        %v1658 = vlaneseq
        %v1659 = vshrl.u32 %v1658, 7
        %v1660 = vsub.s32 %v1657, %v1659
        %v1661 = vrot.slane %v1647, %v1660
        %v1662 = vcombine.low %v1629, %v1645
        %v1663 = vcombine.high %v1629, %v1645
        %v1665 = vunpack.c.l.s4 1934713408
        %v1666 = vunpack.c.0.s8 %v1665
        %v1667 = vlaneseq
        %v1668 = vshrl.u32 %v1667, 7
        %v1669 = vsub.s32 %v1666, %v1668
        %v1670 = vrot.slane %v1662, %v1669
        %v1672 = vunpack.c.l.s4 1934713408
        %v1673 = vunpack.c.0.s8 %v1672
        %v1674 = vlaneseq
        %v1675 = vshrl.u32 %v1674, 7
        %v1676 = vsub.s32 %v1673, %v1675
        %v1677 = vrot.slane %v1663, %v1676
        %v1678 = vcombine.high %v1654, 0.0
        %v1679 = vcombine.high %v1661, 0.0
        %v1680 = vcombine.high %v1670, 0.0
        %v1681 = vcombine.high %v1677, 0.0
        %v1690 = vcombine.low %v1654, %v1678
        %v1691 = vcombine.low %v1661, %v1679
        %v1692 = vcombine.low %v1670, %v1680
        %v1693 = vcombine.low %v1677, %v1681
        %v1698 = vpack.c.bf16 %v1691, %v1690
        %v1699 = vpack.c.bf16 %v1693, %v1692
        %v1700 = vld [vmem:[#allocation13] sm:$0xff]
        %v1701 = vld [vmem:[#allocation13 + $0x8] sm:$0xff]
        %v1702 = vld [vmem:[#allocation13 + $0x10] sm:$0xff]
        %v1703 = vld [vmem:[#allocation13 + $0x18] sm:$0xff]
        %v1704 = vpack.c.bf16 %v1701, %v1700
        %v1705 = vpack.c.bf16 %v1703, %v1702
        %v1706 = vld [vmem:[%s10] sm:$0x1]
        %v1708 = vlaneseq
        %v1709 = vshrl.u32 %v1708, 7
        %v1710 = vsub.s32 0, %v1709
        %v1711 = vrot.slane %v1706, %v1710
        %v1714 = vsel %vm644, %v1698, 0
        %v1717 = vsel %vm644, %v1699, 0
        %1719 = vmatprep.subr.bf16.mxu0 0
        %1720 = vmatpush1.bf16.msra.mxu0 %v1704
        %1721 = vmatprep.subr.bf16.mxu0 0
        %1722 = vmatpush1.bf16.msra.mxu0 %v1705
        %1723 = vmatprep.subr.bf16.mxu0 0
        %1724 = vmatpush1.bf16.msra.mxu0 0
        %1725 = vmatprep.subr.bf16.mxu0 0
        %1726 = vmatpush1.bf16.msra.mxu0 0
        %1727 = vmatprep.subr.bf16.mxu0 0
        %1728 = vmatpush1.bf16.msra.mxu0 0
        %1729 = vmatprep.subr.bf16.mxu0 0
        %1730 = vmatpush1.bf16.msra.mxu0 0
        %1731 = vmatprep.subr.bf16.mxu0 0
        %1732 = vmatpush1.bf16.msra.mxu0 0
        %1733 = vmatprep.subr.bf16.mxu0 0
        %1734 = vmatpush1.bf16.msra.mxu0 0
        %1735 = vmatprep.subr.bf16.mxu0 0
        %1736 = vmatpush1.bf16.msra.mxu0 0
        %1737 = vmatprep.subr.bf16.mxu0 0
        %1738 = vmatpush1.bf16.msra.mxu0 0
        %1739 = vmatprep.subr.bf16.mxu0 0
        %1740 = vmatpush1.bf16.msra.mxu0 0
        %1741 = vmatprep.subr.bf16.mxu0 0
        %1742 = vmatpush1.bf16.msra.mxu0 0
        %1743 = vmatprep.subr.bf16.mxu0 0
        %1744 = vmatpush1.bf16.msra.mxu0 0
        %1745 = vmatprep.subr.bf16.mxu0 0
        %1746 = vmatpush1.bf16.msra.mxu0 0
        %1747 = vmatprep.subr.bf16.mxu0 0
        %1748 = vmatpush1.bf16.msra.mxu0 0
        %1749 = vmatprep.subr.bf16.mxu0 0
        %1750 = vmatpush1.bf16.msra.mxu0 0
        %1751 = vmatprep.mubr.bf16.mxu0 0
        %1752 = vmatmul.mubr.bf16.gmra.mrb[0].mxu0 %v1714
        %v1753 = vpop.f32.mrb[0].mxu0
        %v1754 = vadd.f32 %v1711, %v1753
        %v1755 = vpop.f32.mrb[0].mxu0
        %v1756 = vpop.f32.mrb[0].mxu0
        %v1757 = vadd.f32 %v1711, %v1756
        %v1758 = vpop.f32.mrb[0].mxu0
        %1759 = vmatprep.mubr.bf16.mxu0 0
        %1760 = vmatmul.mubr.bf16.gmra.mrb[0].mxu0 %v1717
        %v1761 = vpop.f32.mrb[0].mxu0
        %v1762 = vadd.f32 %v1711, %v1761
        %v1763 = vpop.f32.mrb[0].mxu0
        %v1764 = vpop.f32.mrb[0].mxu0
        %v1765 = vadd.f32 %v1711, %v1764
        %v1766 = vpop.f32.mrb[0].mxu0
        %1767 = vdwg.mxu0
        %v1768 = vmax.f32 %v1754, 0.0
        %v1769 = vmax.f32 %v1757, 0.0
        %v1770 = vmax.f32 %v1762, 0.0
        %v1771 = vmax.f32 %v1765, 0.0
        %v1776 = vcombine.high %v1768, %v1768
        %v1777 = vcombine.high %v1769, %v1769
        %v1778 = vcombine.high %v1770, %v1770
        %v1779 = vcombine.high %v1771, %v1771
        %vm1784 = vcmask 257024
        %1785 = vst.msk [vmem:[%s595] sm:$0xf] %vm1784, %v1768
        %1786 = vst.msk [vmem:[%s595 + $0x4] sm:$0xf] %vm1784, %v1776
        %1787 = vst.msk [vmem:[%s595 + $0x8] sm:$0xf] %vm1784, %v1769
        %1788 = vst.msk [vmem:[%s595 + $0xc] sm:$0xf] %vm1784, %v1777
        %1789 = vst.msk [vmem:[%s595 + $0x10] sm:$0xf] %vm1784, %v1770
        %1790 = vst.msk [vmem:[%s595 + $0x14] sm:$0xf] %vm1784, %v1778
        %1791 = vst.msk [vmem:[%s595 + $0x18] sm:$0xf] %vm1784, %v1771
        %1792 = vst.msk [vmem:[%s595 + $0x1c] sm:$0xf] %vm1784, %v1779
        %s1793 = sand.u32 %s312, 1
        %s1794 = scalar_lea.sflag [#allocation4], %s1793
        %s1795 = sand.u32 %s312, 1
        %s1796 = smul.addr %s1795, 32
        %s1797 = scalar_lea.vmem [#allocation14], %s1796
        %s1798 = sand.u32 %s340, 1
        %s1799 = scalar_lea.sflag [#allocation16], %s1798
        %s1800 = sand.u32 %s340, 1
        %s1801 = smul.addr %s1800, 32
        %s1802 = scalar_lea.vmem [#allocation15], %s1801
        // Predicated region
        $region93: #{tpu_custom_call.1} parent=63 // pred_check
          %p1803 = pneg %p322
        $region94: #{tpu_custom_call.1} parent=63 // pred_check_branch
          %1805 = sbr.rel (%p1803) target = $region96
        $region95: #{tpu_custom_call.1} parent=63 // pred_region
          %s1807 = ssub.s32 512, 512
          %1808 = vsyncadd %s1794, %s1807
          %s1809 = smul.addr %s42, 8
          %s1810 = sadd.s32 %s43, %s1809
          %s1811 = smul.addr %s1810, 64
          %s1812 = scalar_lea.hbm %s11, %s1811
          %s1813 = sshll.u32 %s1797, 4
          %s1814 = int_to_ptr.vmem [resolvable:$true] %s1813
          %1819 = dma.vmem_to_hbm [thread:$0]  %s1814, 512, %s1812, %s1794, 64, 64, 4
        $region96: #{tpu_custom_call.1} parent=63 // pred_fallthru
          _
        // Predicated region
        $region97: #{tpu_custom_call.1} parent=63 // pred_check
          %p1820 = pneg %p350
        $region98: #{tpu_custom_call.1} parent=63 // pred_check_branch
          %1822 = sbr.rel (%p1820) target = $region100
        $region99: #{tpu_custom_call.1} parent=63 // pred_region
          %s1823 = smul.u32 4, %s43
          %s1825 = ssub.s32 512, 512
          %1826 = vsyncadd %s1799, %s1825
          %s1827 = smul.addr %s42, 4
          %s1828 = sadd.s32 %s1823, %s1827
          %s1829 = smul.addr %s1828, 128
          %s1830 = scalar_lea.hbm %s12, %s1829
          %s1831 = sshll.u32 %s1802, 4
          %s1832 = int_to_ptr.vmem [resolvable:$true] %s1831
          %1837 = dma.vmem_to_hbm [thread:$0]  %s1832, 512, %s1830, %s1799, 128, 128, 8
        $region100: #{tpu_custom_call.1} parent=63 // pred_fallthru
          _
      $region64: #{tpu_custom_call.1} parent=5 // pred_fallthru
        _
      %p1838 = scmp.le.s32.totalorder 2, %s33
      // Predicated region
      $region101: #{tpu_custom_call.1} parent=5 // pred_check
        %p1839 = pneg %p1838
      $region102: #{tpu_custom_call.1} parent=5 // pred_check_branch
        %1841 = sbr.rel (%p1839) target = $region104
      $region103: #{tpu_custom_call.1} parent=5 // pred_region
        %s1842 = ssub.s32 %s33, 2
        // Predicated region
        $region105: #{tpu_custom_call.1} parent=103 // pred_check
          %p1843 = pneg %p328
        $region106: #{tpu_custom_call.1} parent=103 // pred_check_branch
          %1845 = sbr.rel (%p1843) target = $region108
        $region107: #{tpu_custom_call.1} parent=103 // pred_region
          %s1846 = sand.u32 %s313, 1
          %s1847 = scalar_lea.sflag [#allocation4], %s1846
          %s1848 = sand.u32 %s313, 1
          %s1849 = smul.addr %s1848, 32
          %s1850 = scalar_lea.vmem [#allocation14], %s1849
          %1851 = dma.done %s1847, 512
        $region108: #{tpu_custom_call.1} parent=103 // pred_fallthru
          _
        // Predicated region
        $region109: #{tpu_custom_call.1} parent=103 // pred_check
          %p1852 = pneg %p356
        $region110: #{tpu_custom_call.1} parent=103 // pred_check_branch
          %1854 = sbr.rel (%p1852) target = $region112
        $region111: #{tpu_custom_call.1} parent=103 // pred_region
          %s1855 = sand.u32 %s341, 1
          %s1856 = scalar_lea.sflag [#allocation16], %s1855
          %s1857 = sand.u32 %s341, 1
          %s1858 = smul.addr %s1857, 32
          %s1859 = scalar_lea.vmem [#allocation15], %s1858
          %1860 = dma.done %s1856, 512
        $region112: #{tpu_custom_call.1} parent=103 // pred_fallthru
          _
      $region104: #{tpu_custom_call.1} parent=5 // pred_fallthru
        _
    $region6: #{tpu_custom_call.1} parent=1 // loop_footer
      %s37 = sadd.s32 1, %s33
    $region7: #{tpu_custom_call.1} parent=1 // loop_footer_branch
      %32 = sbr.rel target = $region3
    $region8: #{tpu_custom_call.1} parent=1 // loop_exit
      _
    %1861 = vsyncpa [#allocation3], 1
    %s1862 = scalar_lea.sflag [#allocation3], 1
    %1863 = vsyncpa %s1862, 1
    %1864 = vsyncpa [#allocation6], 1
    %s1865 = scalar_lea.sflag [#allocation6], 1
    %1866 = vsyncpa %s1865, 1
    %1867 = vsyncpa [#allocation9], 1
    %1868 = vsyncpa [#allocation12], 1
    %1869 = vsyncpa [#allocation4], 1
    %s1870 = scalar_lea.sflag [#allocation4], 1
    %1871 = vsyncpa %s1870, 1
    %1872 = vsyncpa [#allocation16], 1
    %s1873 = scalar_lea.sflag [#allocation16], 1
    %1874 = vsyncpa %s1873, 1

</llo_original>
